<compile_context>
chip_gen: v6e
topology: v6e:2x2x1
jax: 0.10.0
libtpu: 0.0.40
codegen_flags: <defaults>
</compile_context>

<pallas_src>
import functools

import jax
import jax.numpy as jnp
from jax.experimental import pallas as pl
from jax.experimental.pallas import tpu as pltpu

_LANE = 128


def _vmem_capacity_bytes():
    try:
        return int(pltpu.get_tpu_info().vmem_capacity_bytes)
    except Exception:
        return 64 * 1024 * 1024  # conservative default: v7x per-TensorCore VMEM


def _sublane_multiple(itemsize):
    return {4: 8, 2: 16, 1: 32}.get(int(itemsize), 8)


def _round_up(x, m):
    return -(-x // m) * m


def _pick_block_rows(n_rows, n_cols, itemsize, vmem_cap):
    """Rows per block for a [n_rows, n_cols] slab as seen by the kernel."""
    sub = _sublane_multiple(itemsize)
    lanes = _round_up(n_cols, _LANE)          # lanes actually held in VMEM (padded)
    row_bytes = lanes * itemsize
    # ~2 MiB of lane-padded input-tile bytes: big enough to amortize the ~0.35 us/step
    # pipeline overhead, small enough to leave headroom on v7x's 64 MiB VMEM once the
    # f32 temporaries are counted.
    target_tile_bytes = 2 << 20
    block_rows = max(sub, (target_tile_bytes // row_bytes) // sub * sub)

    def footprint(br):
        tile = br * lanes * itemsize
        # double-buffered in + out tiles, plus ~4 f32 temporaries (x upcast, x-mu,
        # broadcast stats, y) that live in compiler-managed scratch.
        return 4 * tile + 4 * br * lanes * 4

    budget = (vmem_cap * 3) // 4 - (8 << 20)
    while block_rows > sub and footprint(block_rows) > budget:
        block_rows = max(sub, (block_rows // 2) // sub * sub)

    if block_rows >= n_rows:
        if n_rows >= 2 * sub:
            # Never collapse to one grid step when the input permits: >=2 (prefer 4)
            # steps keeps both v7x TensorCores busy and overlaps DMA with compute.
            steps = 4 if n_rows >= 4 * sub else 2
            block_rows = _round_up(-(-n_rows // steps), sub)
        else:
            block_rows = n_rows  # tiny input: whole slab in one (always legal) block
    return block_rows


def _vmem_limit(block_rows, n_cols, itemsize, vmem_cap, extra_bytes=0):
    lanes = _round_up(n_cols, _LANE)
    tile = block_rows * lanes * itemsize
    needed = 4 * tile + 4 * block_rows * lanes * 4 + 4 * lanes * itemsize + extra_bytes
    limit = max(needed + (16 << 20), 32 << 20)
    return int(min(limit, (vmem_cap * 3) // 4))


def _cost(n_rows, d_hid, itemsize):
    # Advisory only: this op is bandwidth bound (one read + one write).
    return pl.CostEstimate(
        flops=int(9 * n_rows * d_hid),
        transcendentals=int(2 * n_rows),
        bytes_accessed=int(2 * n_rows * d_hid * itemsize + 2 * d_hid * itemsize),
    )


def _mm(a, b):
    # f32 matmul at full precision (one-hot segment matrices -> exact sums up to
    # f32 rounding); lands on the MXU which is otherwise idle in this kernel.
    return jax.lax.dot_general(
        a, b, (((1,), (0,)), ((), ())),
        precision=jax.lax.Precision.HIGHEST,
        preferred_element_type=jnp.float32)


def _layernorm_kernel(x_ref, a_ref, b_ref, o_ref, *, eps, affine, d_hid):
    """Plain path: one normalization group per row (d_hid >= 128 or non-folding)."""
    x = x_ref[...].astype(jnp.float32)
    # Two-pass mean/variance: x is resident in VMEM, so the second pass is free of
    # HBM traffic and avoids sum-of-squares cancellation.
    mu = jnp.sum(x, axis=-1, keepdims=True) * jnp.float32(1.0 / d_hid)
    d = x - mu
    var = jnp.sum(d * d, axis=-1, keepdims=True) * jnp.float32(1.0 / (d_hid - 1))
    sigma = jnp.sqrt(var)
    # Exact reciprocal: the approx EUP reciprocal caused the previous tolerance fail.
    inv = jnp.float32(1.0) / (sigma + jnp.float32(eps))
    y = d * inv
    if affine:
        y = y * a_ref[...].astype(jnp.float32) + b_ref[...].astype(jnp.float32)
    o_ref[...] = y.astype(o_ref.dtype)


def _layernorm_folded_kernel(x_ref, a_ref, b_ref, s_ref, st_ref, o_ref,
                             *, eps, affine, d_hid):
    """Lane-folded path for d_hid < 128 (128 % d_hid == 0).

    x_ref: (block_rows, 128) where each 128-lane row holds g = 128/d_hid independent
    normalization groups (consecutive original rows).  s_ref[l, c] = 1 iff
    c == l // d_hid (segment one-hot), st_ref = s_ref.T.  Per-segment reductions and
    broadcasts are done with small matmuls so every load/store/elementwise op stays
    fully lane-dense.
    """
    x = x_ref[...].astype(jnp.float32)
    s = s_ref[...]
    st = st_ref[...]
    sums = _mm(x, s)                                   # per-segment sums (cols < g)
    mu_seg = sums * jnp.float32(1.0 / d_hid)
    mu = _mm(mu_seg, st)                               # broadcast mean back to lanes
    d = x - mu
    ssq = _mm(d * d, s)                                # per-segment sum((x-mu)^2)
    sigma_seg = jnp.sqrt(ssq * jnp.float32(1.0 / (d_hid - 1)))
    inv_seg = jnp.float32(1.0) / (sigma_seg + jnp.float32(eps))
    inv = _mm(inv_seg, st)                             # broadcast 1/(sigma+eps)
    y = d * inv
    if affine:
        y = y * a_ref[...].astype(jnp.float32) + b_ref[...].astype(jnp.float32)
    o_ref[...] = y.astype(o_ref.dtype)


def layer_normalization(z, a_2=None, b_2=None, *, eps=1e-3, affine=True):
    """Pallas equivalent of LayerNormalization.forward.

    Normalizes the last axis with unbiased std (ddof=1), eps added to sigma, then an
    optional affine transform (a_2, b_2).
    """
    d_hid = z.shape[-1]
    if d_hid == 1:
        return z  # matches the torch module's early return for size(-1) == 1
    affine = bool(affine) and (a_2 is not None) and (b_2 is not None)

    orig_shape = z.shape
    dtype = z.dtype
    itemsize = jnp.dtype(dtype).itemsize
    x2d = z.reshape(-1, d_hid)
    n_rows = x2d.shape[0]

    if affine:
        a1 = a_2.reshape(1, d_hid)
        b1 = b_2.reshape(1, d_hid)
    else:
        a1 = jnp.ones((1, d_hid), dtype)
        b1 = jnp.zeros((1, d_hid), dtype)

    vmem_cap = _vmem_capacity_bytes()
    sub = _sublane_multiple(itemsize)

    fold = (d_hid < _LANE) and (_LANE % d_hid == 0)
    if fold:
        g = _LANE // d_hid
        # Pad rows so the folded row count is a multiple of the sublane granule; the
        # zero rows normalize to b (no NaN: eps > 0) and are sliced off afterwards.
        pad = (-n_rows) % (g * sub)
        if pad:
            x2d = jnp.concatenate([x2d, jnp.zeros((pad, d_hid), dtype)], axis=0)
        xk = x2d.reshape(-1, _LANE)                      # free row-major reshape
        ak = jnp.tile(a1, (1, g))                        # feature index = lane % d_hid
        bk = jnp.tile(b1, (1, g))
        lane_idx = jnp.arange(_LANE, dtype=jnp.int32)
        s_mat = (
            (lane_idx // d_hid)[:, None] == lane_idx[None, :]
        ).astype(jnp.float32)                            # (128, 128) one-hot segments
        st_mat = s_mat.T
        n_rows_k, width = xk.shape

        block_rows = _pick_block_rows(n_rows_k, width, itemsize, vmem_cap)
        grid = (pl.cdiv(n_rows_k, block_rows),)
        kernel = functools.partial(_layernorm_folded_kernel, eps=float(eps),
                                   affine=affine, d_hid=d_hid)
        out = pl.pallas_call(
            kernel,
            out_shape=jax.ShapeDtypeStruct((n_rows_k, width), dtype),
            grid_spec=pltpu.PrefetchScalarGridSpec(
                num_scalar_prefetch=0,
                grid=grid,
                in_specs=[
                    pl.BlockSpec((block_rows, width), lambda i: (i, 0)),
                    pl.BlockSpec((1, width), lambda i: (0, 0)),
                    pl.BlockSpec((1, width), lambda i: (0, 0)),
                    pl.BlockSpec((_LANE, _LANE), lambda i: (0, 0)),
                    pl.BlockSpec((_LANE, _LANE), lambda i: (0, 0)),
                ],
                out_specs=pl.BlockSpec((block_rows, width), lambda i: (i, 0)),
            ),
            compiler_params=pltpu.CompilerParams(
                dimension_semantics=("parallel",),
                vmem_limit_bytes=_vmem_limit(block_rows, width, itemsize, vmem_cap,
                                             extra_bytes=4 * _LANE * _LANE * 4),
            ),
            cost_estimate=_cost(n_rows, d_hid, itemsize),
        )(xk, ak, bk, s_mat, st_mat)
        out = out.reshape(-1, d_hid)[:n_rows]
        return out.reshape(orig_shape)

    # Plain path: one group per row.  NOTE: if d_hid is not a multiple of 128, the
    # last vreg of each row is lane-masked (documented lane-utilization limitation).
    block_rows = _pick_block_rows(n_rows, d_hid, itemsize, vmem_cap)
    grid = (pl.cdiv(n_rows, block_rows),)
    kernel = functools.partial(_layernorm_kernel, eps=float(eps),
                               affine=affine, d_hid=d_hid)
    out = pl.pallas_call(
        kernel,
        out_shape=jax.ShapeDtypeStruct((n_rows, d_hid), dtype),
        grid_spec=pltpu.PrefetchScalarGridSpec(
            num_scalar_prefetch=0,
            grid=grid,
            in_specs=[
                pl.BlockSpec((block_rows, d_hid), lambda i: (i, 0)),
                pl.BlockSpec((1, d_hid), lambda i: (0, 0)),
                pl.BlockSpec((1, d_hid), lambda i: (0, 0)),
            ],
            out_specs=pl.BlockSpec((block_rows, d_hid), lambda i: (i, 0)),
        ),
        compiler_params=pltpu.CompilerParams(
            dimension_semantics=("parallel",),
            vmem_limit_bytes=_vmem_limit(block_rows, d_hid, itemsize, vmem_cap),
        ),
        cost_estimate=_cost(n_rows, d_hid, itemsize),
    )(x2d, a1, b1)
    return out.reshape(orig_shape)


def _reference(z, a, b, eps):
    mu = jnp.mean(z, axis=-1, keepdims=True)
    sigma = jnp.std(z, axis=-1, keepdims=True, ddof=1)   # torch.std default: unbiased
    return (z - mu) / (sigma + eps) * a + b


if __name__ == "__main__":
    key = jax.random.PRNGKey(0)
    eps = 1e-3
    k1, k2, k3, k4, k5 = jax.random.split(key, 5)

    # Case 1: module-shaped demo (batch=2, seq=8, d_hid=32) -> lane-folded kernel.
    batch, seq, d_hid = 2, 8, 32
    z = jax.random.normal(k1, (batch, seq, d_hid), dtype=jnp.float32)
    a_2 = jnp.ones((d_hid,), jnp.float32)     # module __init__: ones / zeros
    b_2 = jnp.zeros((d_hid,), jnp.float32)
    out = jax.block_until_ready(layer_normalization(z, a_2, b_2, eps=eps, affine=True))
    assert out.shape == z.shape
    ref = _reference(z, a_2, b_2, eps)
    assert jnp.allclose(out, ref, atol=1e-3, rtol=1e-3), "folded path mismatch"

    # Case 2: d_hid >= 128 -> plain per-row kernel with a multi-step grid.
    d_hid2 = 256
    z2 = jax.random.normal(k2, (4, 16, d_hid2), dtype=jnp.float32)
    a2 = 1.0 + 0.1 * jax.random.normal(k3, (d_hid2,), dtype=jnp.float32)
    b2 = 0.1 * jax.random.normal(k4, (d_hid2,), dtype=jnp.float32)
    out2 = jax.block_until_ready(layer_normalization(z2, a2, b2, eps=eps, affine=True))
    ref2 = _reference(z2, a2, b2, eps)
    assert jnp.allclose(out2, ref2, atol=1e-3, rtol=1e-3), "plain path mismatch"

    # Case 3: row count not aligned to the fold factor (exercises padding) + affine.
    z3 = jax.random.normal(k5, (3, 5, d_hid), dtype=jnp.float32)
    out3 = jax.block_until_ready(layer_normalization(z3, a_2, b_2, eps=eps, affine=True))
    ref3 = _reference(z3, a_2, b_2, eps)
    assert jnp.allclose(out3, ref3, atol=1e-3, rtol=1e-3), "padded fold mismatch"

    print("KERNEL_OK")
</pallas_src>

<mosaic_0001>
module attributes {stable_mosaic.version = 11 : i64} {
  func.func @_layernorm_folded_kernel(%arg0: i32, %arg1: memref<8x128xf32, #tpu.memory_space<vmem>>, %arg2: memref<1x128xf32, #tpu.memory_space<vmem>>, %arg3: memref<1x128xf32, #tpu.memory_space<vmem>>, %arg4: memref<128x128xf32, #tpu.memory_space<vmem>>, %arg5: memref<128x128xf32, #tpu.memory_space<vmem>>, %arg6: memref<8x128xf32, #tpu.memory_space<vmem>>) attributes {dimension_semantics = [#tpu.dimension_semantics<parallel>], iteration_bounds = array<i64: 1>, scalar_prefetch = 0 : i64, scratch_operands = 0 : i64, tpu.core_type = #tpu.core_type<tc>, window_params = [{transform_indices = @transform_0, window_bounds = array<i64: 8, 128>}, {pipeline_mode = #tpu.pipeline_mode<synchronous>, transform_indices = @transform_1, window_bounds = array<i64: 1, 128>}, {pipeline_mode = #tpu.pipeline_mode<synchronous>, transform_indices = @transform_2, window_bounds = array<i64: 1, 128>}, {pipeline_mode = #tpu.pipeline_mode<synchronous>, transform_indices = @transform_3, window_bounds = array<i64: 128, 128>}, {pipeline_mode = #tpu.pipeline_mode<synchronous>, transform_indices = @transform_4, window_bounds = array<i64: 128, 128>}, {transform_indices = @transform_5, window_bounds = array<i64: 8, 128>}]} {
    %c0 = arith.constant 0 : index
    %c0_0 = arith.constant 0 : index
    %0 = vector.load %arg1[%c0, %c0_0] : memref<8x128xf32, #tpu.memory_space<vmem>>, vector<8x128xf32>
    %c0_1 = arith.constant 0 : index
    %c0_2 = arith.constant 0 : index
    %1 = vector.load %arg4[%c0_1, %c0_2] : memref<128x128xf32, #tpu.memory_space<vmem>>, vector<128x128xf32>
    %c0_3 = arith.constant 0 : index
    %c0_4 = arith.constant 0 : index
    %2 = vector.load %arg5[%c0_3, %c0_4] : memref<128x128xf32, #tpu.memory_space<vmem>>, vector<128x128xf32>
    %cst = arith.constant dense<0.000000e+00> : vector<8x128xf32>
    %3 = tpu.matmul %0, %1, %cst {dimension_numbers = #tpu.dot_dimension_numbers<[1], [0], [0], [1], [0, 0, 1, 1], [], []>, precision = #tpu.contract_precision<fp32>} : vector<8x128xf32>, vector<128x128xf32>, vector<8x128xf32> -> vector<8x128xf32>
    %cst_5 = arith.constant 3.125000e-02 : f32
    %4 = vector.broadcast %cst_5 : f32 to vector<8x128xf32>
    %5 = arith.mulf %3, %4 : vector<8x128xf32>
    %cst_6 = arith.constant dense<0.000000e+00> : vector<8x128xf32>
    %6 = tpu.matmul %5, %2, %cst_6 {dimension_numbers = #tpu.dot_dimension_numbers<[1], [0], [0], [1], [0, 0, 1, 1], [], []>, precision = #tpu.contract_precision<fp32>} : vector<8x128xf32>, vector<128x128xf32>, vector<8x128xf32> -> vector<8x128xf32>
    %7 = arith.subf %0, %6 : vector<8x128xf32>
    %8 = arith.mulf %7, %7 : vector<8x128xf32>
    %cst_7 = arith.constant dense<0.000000e+00> : vector<8x128xf32>
    %9 = tpu.matmul %8, %1, %cst_7 {dimension_numbers = #tpu.dot_dimension_numbers<[1], [0], [0], [1], [0, 0, 1, 1], [], []>, precision = #tpu.contract_precision<fp32>} : vector<8x128xf32>, vector<128x128xf32>, vector<8x128xf32> -> vector<8x128xf32>
    %cst_8 = arith.constant 0.0322580636 : f32
    %10 = vector.broadcast %cst_8 : f32 to vector<8x128xf32>
    %11 = arith.mulf %9, %10 : vector<8x128xf32>
    %12 = math.sqrt %11 : vector<8x128xf32>
    %cst_9 = arith.constant 1.000000e-03 : f32
    %13 = vector.broadcast %cst_9 : f32 to vector<8x128xf32>
    %14 = arith.addf %12, %13 : vector<8x128xf32>
    %cst_10 = arith.constant 1.000000e+00 : f32
    %15 = vector.broadcast %cst_10 : f32 to vector<8x128xf32>
    %16 = arith.divf %15, %14 : vector<8x128xf32>
    %cst_11 = arith.constant dense<0.000000e+00> : vector<8x128xf32>
    %17 = tpu.matmul %16, %2, %cst_11 {dimension_numbers = #tpu.dot_dimension_numbers<[1], [0], [0], [1], [0, 0, 1, 1], [], []>, precision = #tpu.contract_precision<fp32>} : vector<8x128xf32>, vector<128x128xf32>, vector<8x128xf32> -> vector<8x128xf32>
    %18 = arith.mulf %7, %17 : vector<8x128xf32>
    %c0_12 = arith.constant 0 : index
    %c0_13 = arith.constant 0 : index
    %19 = vector.load %arg2[%c0_12, %c0_13] : memref<1x128xf32, #tpu.memory_space<vmem>>, vector<1x128xf32>
    %20 = vector.broadcast %19 : vector<1x128xf32> to vector<8x128xf32>
    %21 = arith.mulf %18, %20 : vector<8x128xf32>
    %c0_14 = arith.constant 0 : index
    %c0_15 = arith.constant 0 : index
    %22 = vector.load %arg3[%c0_14, %c0_15] : memref<1x128xf32, #tpu.memory_space<vmem>>, vector<1x128xf32>
    %23 = vector.broadcast %22 : vector<1x128xf32> to vector<8x128xf32>
    %24 = arith.addf %21, %23 : vector<8x128xf32>
    %c0_16 = arith.constant 0 : index
    %c0_17 = arith.constant 0 : index
    %25 = vector.load %arg6[%c0_16, %c0_17] : memref<8x128xf32, #tpu.memory_space<vmem>>, vector<8x128xf32>
    tpu.vector_store %arg6[%c0_16, %c0_17], %24 {strides = array<i32>} : memref<8x128xf32, #tpu.memory_space<vmem>>, vector<8x128xf32>,
    return
  }
  func.func @transform_0(%arg0: i32) -> (i32, i32) {
    %c0_i32 = arith.constant 0 : i32
    %c0_i32_0 = arith.constant 0 : i32
    return %arg0, %c0_i32 : i32, i32
  }
  func.func @transform_1(%arg0: i32) -> (i32, i32) {
    %c0_i32 = arith.constant 0 : i32
    %c0_i32_0 = arith.constant 0 : i32
    %c0_i32_1 = arith.constant 0 : i32
    return %c0_i32, %c0_i32_0 : i32, i32
  }
  func.func @transform_2(%arg0: i32) -> (i32, i32) {
    %c0_i32 = arith.constant 0 : i32
    %c0_i32_0 = arith.constant 0 : i32
    %c0_i32_1 = arith.constant 0 : i32
    return %c0_i32, %c0_i32_0 : i32, i32
  }
  func.func @transform_3(%arg0: i32) -> (i32, i32) {
    %c0_i32 = arith.constant 0 : i32
    %c0_i32_0 = arith.constant 0 : i32
    %c0_i32_1 = arith.constant 0 : i32
    return %c0_i32, %c0_i32_0 : i32, i32
  }
  func.func @transform_4(%arg0: i32) -> (i32, i32) {
    %c0_i32 = arith.constant 0 : i32
    %c0_i32_0 = arith.constant 0 : i32
    %c0_i32_1 = arith.constant 0 : i32
    return %c0_i32, %c0_i32_0 : i32, i32
  }
  func.func @transform_5(%arg0: i32) -> (i32, i32) {
    %c0_i32 = arith.constant 0 : i32
    %c0_i32_0 = arith.constant 0 : i32
    return %arg0, %c0_i32 : i32, i32
  }
}

</mosaic_0001>

<llo_original>
// kernel: tpu_custom_call.1
$region0: #{tpu_custom_call.1}
  #allocation0 [shape = 'u32[]', space=smem, size = 0x4, offset = 0x4, fixed_abs, tag = 'smem constant byte address 0x4 - core index']
  #allocation1 [shape = 'u32[144,128]{1,0:T(1,128)}', space=vmem, size = 0x12000, scoped, tag = 'internal scratch']
  %s0 = inlined_call_operand.hbm [shape: f32[8,128], index: 0, kind: input, shape index: {}]
  %s1 = inlined_call_operand.vmem [shape: f32[1,128], index: 1, kind: input, shape index: {}]
  %s2 = inlined_call_operand.vmem [shape: f32[1,128], index: 2, kind: input, shape index: {}]
  %s3 = inlined_call_operand.hbm [shape: f32[128,128], index: 3, kind: input, shape index: {}]
  %s4 = inlined_call_operand.hbm [shape: f32[128,128], index: 4, kind: input, shape index: {}]
  %s5 = inlined_call_operand.hbm [shape: f32[8,128], index: 5, kind: output, shape index: {}]
  %s6 = sld [smem:[#allocation0]]
  $region42: #{tpu_custom_call.1} parent=0
    _
  %s8 = ssub.s32 1, %s6
  %s9 = scalar_select 0, %s8, %s6
  $region1: #{tpu_custom_call.1} parent=0
    #allocation2 [shape = 'u8[4096]{0}', space=vmem, size = 0x1000, scoped, tag = 'input window, operand 0, single buffered']
    #allocation3 [shape = 's32[1]{0}', space=sflag, size = 0x4, scoped, tag = 'scoped memory for tpu_custom_call.1']
    #allocation4 [shape = 's32[1]{0}', space=sflag, size = 0x4, scoped, tag = 'scoped memory for tpu_custom_call.1']
    #allocation5 [shape = 'u8[65536]{0}', space=vmem, size = 0x10000, scoped, tag = 'input window, operand 3, single buffered']
    #allocation6 [shape = 's32[1]{0}', space=sflag, size = 0x4, scoped, tag = 'scoped memory for tpu_custom_call.1']
    #allocation7 [shape = 'u8[65536]{0}', space=vmem, size = 0x10000, scoped, tag = 'input window, operand 4, single buffered']
    #allocation8 [shape = 'u8[4096]{0}', space=vmem, size = 0x1000, scoped, tag = 'output window, operand 0, single buffered']
    %10 = vsyncpa [#allocation3], 0
    %11 = vsyncpa [#allocation6], 0
    %12 = vsyncpa [#allocation4], 0
    // Predicated region
    $region2: #{tpu_custom_call.1} parent=1 // pred_check
      _
    $region3: #{tpu_custom_call.1} parent=1 // pred_check_branch
      %14 = sbr.rel (0) target = $region5
    $region4: #{tpu_custom_call.1} parent=1 // pred_region
      %s16 = ssub.s32 128, 128
      %17 = vsyncadd [#allocation3], %s16
      %s19 = sshll.u32 [#allocation2], 4
      %s20 = int_to_ptr.vmem [resolvable:$true] %s19
      %22 = dma.hbm_to_vmem [thread:$0]  %s0, 128, %s20, [#allocation3]
    $region5: #{tpu_custom_call.1} parent=1 // pred_fallthru
      _
    // Predicated region
    $region6: #{tpu_custom_call.1} parent=1 // pred_check
      _
    $region7: #{tpu_custom_call.1} parent=1 // pred_check_branch
      %24 = sbr.rel (0) target = $region9
    $region8: #{tpu_custom_call.1} parent=1 // pred_region
      _
    $region9: #{tpu_custom_call.1} parent=1 // pred_fallthru
      _
    // Predicated region
    $region10: #{tpu_custom_call.1} parent=1 // pred_check
      _
    $region11: #{tpu_custom_call.1} parent=1 // pred_check_branch
      %26 = sbr.rel (0) target = $region13
    $region12: #{tpu_custom_call.1} parent=1 // pred_region
      _
    $region13: #{tpu_custom_call.1} parent=1 // pred_fallthru
      _
    // Predicated region
    $region14: #{tpu_custom_call.1} parent=1 // pred_check
      _
    $region15: #{tpu_custom_call.1} parent=1 // pred_check_branch
      %28 = sbr.rel (0) target = $region17
    $region16: #{tpu_custom_call.1} parent=1 // pred_region
      %s30 = ssub.s32 2048, 2048
      %31 = vsyncadd [#allocation6], %s30
      %s32 = sshll.u32 [#allocation5], 4
      %s33 = int_to_ptr.vmem [resolvable:$true] %s32
      %38 = dma.hbm_to_vmem [thread:$0]  %s3, 2048, %s33, [#allocation6], 128, 128, 8
    $region17: #{tpu_custom_call.1} parent=1 // pred_fallthru
      _
    // Predicated region
    $region18: #{tpu_custom_call.1} parent=1 // pred_check
      _
    $region19: #{tpu_custom_call.1} parent=1 // pred_check_branch
      %40 = sbr.rel (0) target = $region21
    $region20: #{tpu_custom_call.1} parent=1 // pred_region
      %s42 = ssub.s32 2048, 2048
      %43 = vsyncadd [#allocation6], %s42
      %s44 = sshll.u32 [#allocation7], 4
      %s45 = int_to_ptr.vmem [resolvable:$true] %s44
      %50 = dma.hbm_to_vmem [thread:$0]  %s4, 2048, %s45, [#allocation6], 128, 128, 8
    $region21: #{tpu_custom_call.1} parent=1 // pred_fallthru
      _
    // Predicated region
    $region22: #{tpu_custom_call.1} parent=1 // pred_check
      _
    $region23: #{tpu_custom_call.1} parent=1 // pred_check_branch
      %52 = sbr.rel (0) target = $region25
    $region24: #{tpu_custom_call.1} parent=1 // pred_region
      %53 = dma.done [#allocation3], 128
    $region25: #{tpu_custom_call.1} parent=1 // pred_fallthru
      _
    // Predicated region
    $region26: #{tpu_custom_call.1} parent=1 // pred_check
      _
    $region27: #{tpu_custom_call.1} parent=1 // pred_check_branch
      %55 = sbr.rel (0) target = $region29
    $region28: #{tpu_custom_call.1} parent=1 // pred_region
      %56 = dma.done [#allocation6], 2048
    $region29: #{tpu_custom_call.1} parent=1 // pred_fallthru
      _
    // Predicated region
    $region30: #{tpu_custom_call.1} parent=1 // pred_check
      _
    $region31: #{tpu_custom_call.1} parent=1 // pred_check_branch
      %58 = sbr.rel (0) target = $region33
    $region32: #{tpu_custom_call.1} parent=1 // pred_region
      %59 = dma.done [#allocation6], 2048
    $region33: #{tpu_custom_call.1} parent=1 // pred_fallthru
      _
    %v60 = vld [vmem:[#allocation2] sm:$0xff]
    %v61 = vld [vmem:[#allocation5] sm:$0xff]
    %v62 = vld [vmem:[#allocation5 + $0x8] sm:$0xff]
    %v63 = vld [vmem:[#allocation5 + $0x10] sm:$0xff]
    %v64 = vld [vmem:[#allocation5 + $0x18] sm:$0xff]
    %v65 = vld [vmem:[#allocation5 + $0x20] sm:$0xff]
    %v66 = vld [vmem:[#allocation5 + $0x28] sm:$0xff]
    %v67 = vld [vmem:[#allocation5 + $0x30] sm:$0xff]
    %v68 = vld [vmem:[#allocation5 + $0x38] sm:$0xff]
    %v69 = vld [vmem:[#allocation5 + $0x40] sm:$0xff]
    %v70 = vld [vmem:[#allocation5 + $0x48] sm:$0xff]
    %v71 = vld [vmem:[#allocation5 + $0x50] sm:$0xff]
    %v72 = vld [vmem:[#allocation5 + $0x58] sm:$0xff]
    %v73 = vld [vmem:[#allocation5 + $0x60] sm:$0xff]
    %v74 = vld [vmem:[#allocation5 + $0x68] sm:$0xff]
    %v75 = vld [vmem:[#allocation5 + $0x70] sm:$0xff]
    %v76 = vld [vmem:[#allocation5 + $0x78] sm:$0xff]
    %v77 = vld [vmem:[#allocation7] sm:$0xff]
    %v78 = vld [vmem:[#allocation7 + $0x8] sm:$0xff]
    %v79 = vld [vmem:[#allocation7 + $0x10] sm:$0xff]
    %v80 = vld [vmem:[#allocation7 + $0x18] sm:$0xff]
    %v81 = vld [vmem:[#allocation7 + $0x20] sm:$0xff]
    %v82 = vld [vmem:[#allocation7 + $0x28] sm:$0xff]
    %v83 = vld [vmem:[#allocation7 + $0x30] sm:$0xff]
    %v84 = vld [vmem:[#allocation7 + $0x38] sm:$0xff]
    %v85 = vld [vmem:[#allocation7 + $0x40] sm:$0xff]
    %v86 = vld [vmem:[#allocation7 + $0x48] sm:$0xff]
    %v87 = vld [vmem:[#allocation7 + $0x50] sm:$0xff]
    %v88 = vld [vmem:[#allocation7 + $0x58] sm:$0xff]
    %v89 = vld [vmem:[#allocation7 + $0x60] sm:$0xff]
    %v90 = vld [vmem:[#allocation7 + $0x68] sm:$0xff]
    %v91 = vld [vmem:[#allocation7 + $0x70] sm:$0xff]
    %v92 = vld [vmem:[#allocation7 + $0x78] sm:$0xff]
    %93 = vmatprep.subr.mxu0 0.0
    %v94 = vand.u32 %v76, 4294901760
    %95 = vmatpush1.msra.mxu0 %v94
    %96 = vmatprep.subr.mxu0 0.0
    %v97 = vand.u32 %v75, 4294901760
    %98 = vmatpush1.msra.mxu0 %v97
    %99 = vmatprep.subr.mxu0 0.0
    %v100 = vand.u32 %v74, 4294901760
    %101 = vmatpush1.msra.mxu0 %v100
    %102 = vmatprep.subr.mxu0 0.0
    %v103 = vand.u32 %v73, 4294901760
    %104 = vmatpush1.msra.mxu0 %v103
    %105 = vmatprep.subr.mxu0 0.0
    %v106 = vand.u32 %v72, 4294901760
    %107 = vmatpush1.msra.mxu0 %v106
    %108 = vmatprep.subr.mxu0 0.0
    %v109 = vand.u32 %v71, 4294901760
    %110 = vmatpush1.msra.mxu0 %v109
    %111 = vmatprep.subr.mxu0 0.0
    %v112 = vand.u32 %v70, 4294901760
    %113 = vmatpush1.msra.mxu0 %v112
    %114 = vmatprep.subr.mxu0 0.0
    %v115 = vand.u32 %v69, 4294901760
    %116 = vmatpush1.msra.mxu0 %v115
    %117 = vmatprep.subr.mxu0 0.0
    %v118 = vand.u32 %v68, 4294901760
    %119 = vmatpush1.msra.mxu0 %v118
    %120 = vmatprep.subr.mxu0 0.0
    %v121 = vand.u32 %v67, 4294901760
    %122 = vmatpush1.msra.mxu0 %v121
    %123 = vmatprep.subr.mxu0 0.0
    %v124 = vand.u32 %v66, 4294901760
    %125 = vmatpush1.msra.mxu0 %v124
    %126 = vmatprep.subr.mxu0 0.0
    %v127 = vand.u32 %v65, 4294901760
    %128 = vmatpush1.msra.mxu0 %v127
    %129 = vmatprep.subr.mxu0 0.0
    %v130 = vand.u32 %v64, 4294901760
    %131 = vmatpush1.msra.mxu0 %v130
    %132 = vmatprep.subr.mxu0 0.0
    %v133 = vand.u32 %v63, 4294901760
    %134 = vmatpush1.msra.mxu0 %v133
    %135 = vmatprep.subr.mxu0 0.0
    %v136 = vand.u32 %v62, 4294901760
    %137 = vmatpush1.msra.mxu0 %v136
    %138 = vmatprep.subr.mxu0 0.0
    %v139 = vand.u32 %v61, 4294901760
    %140 = vmatpush1.msra.mxu0 %v139
    %141 = vmatprep.subr.mxu0 0.0
    %142 = vmatpush2.msra.mxu0 0.0
    %143 = vmatprep.subr.mxu0 0.0
    %144 = vmatpush2.msra.mxu0 0.0
    %145 = vmatprep.subr.mxu0 0.0
    %146 = vmatpush2.msra.mxu0 0.0
    %147 = vmatprep.subr.mxu0 0.0
    %148 = vmatpush2.msra.mxu0 0.0
    %149 = vmatprep.subr.mxu0 0.0
    %150 = vmatpush2.msra.mxu0 0.0
    %151 = vmatprep.subr.mxu0 0.0
    %152 = vmatpush2.msra.mxu0 0.0
    %153 = vmatprep.subr.mxu0 0.0
    %154 = vmatpush2.msra.mxu0 0.0
    %155 = vmatprep.subr.mxu0 0.0
    %156 = vmatpush2.msra.mxu0 0.0
    %157 = vmatprep.subr.mxu0 0.0
    %158 = vmatpush2.msra.mxu0 0.0
    %159 = vmatprep.subr.mxu0 0.0
    %160 = vmatpush2.msra.mxu0 0.0
    %161 = vmatprep.subr.mxu0 0.0
    %162 = vmatpush2.msra.mxu0 0.0
    %163 = vmatprep.subr.mxu0 0.0
    %164 = vmatpush2.msra.mxu0 0.0
    %165 = vmatprep.subr.mxu0 0.0
    %166 = vmatpush2.msra.mxu0 0.0
    %167 = vmatprep.subr.mxu0 0.0
    %168 = vmatpush2.msra.mxu0 0.0
    %169 = vmatprep.subr.mxu0 0.0
    %170 = vmatpush2.msra.mxu0 0.0
    %171 = vmatprep.subr.mxu0 0.0
    %172 = vmatpush2.msra.mxu0 0.0
    %173 = vmatprep.mubr.f32.mxu0 0.0
    %v174 = vand.u32 %v60, 4294901760
    %v175 = vsub.f32 %v60, %v174
    %v176 = vand.u32 %v175, 4294901760
    %v177 = vsub.f32 %v175, %v176
    %v178 = vand.u32 %v177, 4294901760
    %179 = vmatmul.mubr.f32.gmra.mxu0 %v178
    %v180 = vpop.f32.mrf.mxu0
    %v181 = vadd.f32 0.0, %v180
    %v182 = vpop.f32.mrf.mxu0
    %183 = vdwg.mxu0
    %184 = vmatprep.subr.mxu0 0.0
    %v185 = vand.u32 %v76, 4294901760
    %v186 = vsub.f32 %v76, %v185
    %v187 = vand.u32 %v186, 4294901760
    %v188 = vsub.f32 %v186, %v187
    %v189 = vand.u32 %v188, 4294901760
    %190 = vmatpush1.msra.mxu0 %v189
    %191 = vmatprep.subr.mxu0 0.0
    %v192 = vand.u32 %v75, 4294901760
    %v193 = vsub.f32 %v75, %v192
    %v194 = vand.u32 %v193, 4294901760
    %v195 = vsub.f32 %v193, %v194
    %v196 = vand.u32 %v195, 4294901760
    %197 = vmatpush1.msra.mxu0 %v196
    %198 = vmatprep.subr.mxu0 0.0
    %v199 = vand.u32 %v74, 4294901760
    %v200 = vsub.f32 %v74, %v199
    %v201 = vand.u32 %v200, 4294901760
    %v202 = vsub.f32 %v200, %v201
    %v203 = vand.u32 %v202, 4294901760
    %204 = vmatpush1.msra.mxu0 %v203
    %205 = vmatprep.subr.mxu0 0.0
    %v206 = vand.u32 %v73, 4294901760
    %v207 = vsub.f32 %v73, %v206
    %v208 = vand.u32 %v207, 4294901760
    %v209 = vsub.f32 %v207, %v208
    %v210 = vand.u32 %v209, 4294901760
    %211 = vmatpush1.msra.mxu0 %v210
    %212 = vmatprep.subr.mxu0 0.0
    %v213 = vand.u32 %v72, 4294901760
    %v214 = vsub.f32 %v72, %v213
    %v215 = vand.u32 %v214, 4294901760
    %v216 = vsub.f32 %v214, %v215
    %v217 = vand.u32 %v216, 4294901760
    %218 = vmatpush1.msra.mxu0 %v217
    %219 = vmatprep.subr.mxu0 0.0
    %v220 = vand.u32 %v71, 4294901760
    %v221 = vsub.f32 %v71, %v220
    %v222 = vand.u32 %v221, 4294901760
    %v223 = vsub.f32 %v221, %v222
    %v224 = vand.u32 %v223, 4294901760
    %225 = vmatpush1.msra.mxu0 %v224
    %226 = vmatprep.subr.mxu0 0.0
    %v227 = vand.u32 %v70, 4294901760
    %v228 = vsub.f32 %v70, %v227
    %v229 = vand.u32 %v228, 4294901760
    %v230 = vsub.f32 %v228, %v229
    %v231 = vand.u32 %v230, 4294901760
    %232 = vmatpush1.msra.mxu0 %v231
    %233 = vmatprep.subr.mxu0 0.0
    %v234 = vand.u32 %v69, 4294901760
    %v235 = vsub.f32 %v69, %v234
    %v236 = vand.u32 %v235, 4294901760
    %v237 = vsub.f32 %v235, %v236
    %v238 = vand.u32 %v237, 4294901760
    %239 = vmatpush1.msra.mxu0 %v238
    %240 = vmatprep.subr.mxu0 0.0
    %v241 = vand.u32 %v68, 4294901760
    %v242 = vsub.f32 %v68, %v241
    %v243 = vand.u32 %v242, 4294901760
    %v244 = vsub.f32 %v242, %v243
    %v245 = vand.u32 %v244, 4294901760
    %246 = vmatpush1.msra.mxu0 %v245
    %247 = vmatprep.subr.mxu0 0.0
    %v248 = vand.u32 %v67, 4294901760
    %v249 = vsub.f32 %v67, %v248
    %v250 = vand.u32 %v249, 4294901760
    %v251 = vsub.f32 %v249, %v250
    %v252 = vand.u32 %v251, 4294901760
    %253 = vmatpush1.msra.mxu0 %v252
    %254 = vmatprep.subr.mxu0 0.0
    %v255 = vand.u32 %v66, 4294901760
    %v256 = vsub.f32 %v66, %v255
    %v257 = vand.u32 %v256, 4294901760
    %v258 = vsub.f32 %v256, %v257
    %v259 = vand.u32 %v258, 4294901760
    %260 = vmatpush1.msra.mxu0 %v259
    %261 = vmatprep.subr.mxu0 0.0
    %v262 = vand.u32 %v65, 4294901760
    %v263 = vsub.f32 %v65, %v262
    %v264 = vand.u32 %v263, 4294901760
    %v265 = vsub.f32 %v263, %v264
    %v266 = vand.u32 %v265, 4294901760
    %267 = vmatpush1.msra.mxu0 %v266
    %268 = vmatprep.subr.mxu0 0.0
    %v269 = vand.u32 %v64, 4294901760
    %v270 = vsub.f32 %v64, %v269
    %v271 = vand.u32 %v270, 4294901760
    %v272 = vsub.f32 %v270, %v271
    %v273 = vand.u32 %v272, 4294901760
    %274 = vmatpush1.msra.mxu0 %v273
    %275 = vmatprep.subr.mxu0 0.0
    %v276 = vand.u32 %v63, 4294901760
    %v277 = vsub.f32 %v63, %v276
    %v278 = vand.u32 %v277, 4294901760
    %v279 = vsub.f32 %v277, %v278
    %v280 = vand.u32 %v279, 4294901760
    %281 = vmatpush1.msra.mxu0 %v280
    %282 = vmatprep.subr.mxu0 0.0
    %v283 = vand.u32 %v62, 4294901760
    %v284 = vsub.f32 %v62, %v283
    %v285 = vand.u32 %v284, 4294901760
    %v286 = vsub.f32 %v284, %v285
    %v287 = vand.u32 %v286, 4294901760
    %288 = vmatpush1.msra.mxu0 %v287
    %289 = vmatprep.subr.mxu0 0.0
    %v290 = vand.u32 %v61, 4294901760
    %v291 = vsub.f32 %v61, %v290
    %v292 = vand.u32 %v291, 4294901760
    %v293 = vsub.f32 %v291, %v292
    %v294 = vand.u32 %v293, 4294901760
    %295 = vmatpush1.msra.mxu0 %v294
    %296 = vmatprep.subr.mxu0 0.0
    %297 = vmatpush2.msra.mxu0 0.0
    %298 = vmatprep.subr.mxu0 0.0
    %299 = vmatpush2.msra.mxu0 0.0
    %300 = vmatprep.subr.mxu0 0.0
    %301 = vmatpush2.msra.mxu0 0.0
    %302 = vmatprep.subr.mxu0 0.0
    %303 = vmatpush2.msra.mxu0 0.0
    %304 = vmatprep.subr.mxu0 0.0
    %305 = vmatpush2.msra.mxu0 0.0
    %306 = vmatprep.subr.mxu0 0.0
    %307 = vmatpush2.msra.mxu0 0.0
    %308 = vmatprep.subr.mxu0 0.0
    %309 = vmatpush2.msra.mxu0 0.0
    %310 = vmatprep.subr.mxu0 0.0
    %311 = vmatpush2.msra.mxu0 0.0
    %312 = vmatprep.subr.mxu0 0.0
    %313 = vmatpush2.msra.mxu0 0.0
    %314 = vmatprep.subr.mxu0 0.0
    %315 = vmatpush2.msra.mxu0 0.0
    %316 = vmatprep.subr.mxu0 0.0
    %317 = vmatpush2.msra.mxu0 0.0
    %318 = vmatprep.subr.mxu0 0.0
    %319 = vmatpush2.msra.mxu0 0.0
    %320 = vmatprep.subr.mxu0 0.0
    %321 = vmatpush2.msra.mxu0 0.0
    %322 = vmatprep.subr.mxu0 0.0
    %323 = vmatpush2.msra.mxu0 0.0
    %324 = vmatprep.subr.mxu0 0.0
    %325 = vmatpush2.msra.mxu0 0.0
    %326 = vmatprep.subr.mxu0 0.0
    %327 = vmatpush2.msra.mxu0 0.0
    %328 = vmatprep.mubr.f32.mxu0 0.0
    %v329 = vand.u32 %v60, 4294901760
    %330 = vmatmul.mubr.f32.gmra.mxu0 %v329
    %v331 = vpop.f32.mrf.mxu0
    %v332 = vadd.f32 %v181, %v331
    %v333 = vpop.f32.mrf.mxu0
    %334 = vdwg.mxu0
    %335 = vmatprep.subr.mxu0 0.0
    %v336 = vand.u32 %v76, 4294901760
    %v337 = vsub.f32 %v76, %v336
    %338 = vmatpush1.msra.mxu0 %v337
    %339 = vmatprep.subr.mxu0 0.0
    %v340 = vand.u32 %v75, 4294901760
    %v341 = vsub.f32 %v75, %v340
    %342 = vmatpush1.msra.mxu0 %v341
    %343 = vmatprep.subr.mxu0 0.0
    %v344 = vand.u32 %v74, 4294901760
    %v345 = vsub.f32 %v74, %v344
    %346 = vmatpush1.msra.mxu0 %v345
    %347 = vmatprep.subr.mxu0 0.0
    %v348 = vand.u32 %v73, 4294901760
    %v349 = vsub.f32 %v73, %v348
    %350 = vmatpush1.msra.mxu0 %v349
    %351 = vmatprep.subr.mxu0 0.0
    %v352 = vand.u32 %v72, 4294901760
    %v353 = vsub.f32 %v72, %v352
    %354 = vmatpush1.msra.mxu0 %v353
    %355 = vmatprep.subr.mxu0 0.0
    %v356 = vand.u32 %v71, 4294901760
    %v357 = vsub.f32 %v71, %v356
    %358 = vmatpush1.msra.mxu0 %v357
    %359 = vmatprep.subr.mxu0 0.0
    %v360 = vand.u32 %v70, 4294901760
    %v361 = vsub.f32 %v70, %v360
    %362 = vmatpush1.msra.mxu0 %v361
    %363 = vmatprep.subr.mxu0 0.0
    %v364 = vand.u32 %v69, 4294901760
    %v365 = vsub.f32 %v69, %v364
    %366 = vmatpush1.msra.mxu0 %v365
    %367 = vmatprep.subr.mxu0 0.0
    %v368 = vand.u32 %v68, 4294901760
    %v369 = vsub.f32 %v68, %v368
    %370 = vmatpush1.msra.mxu0 %v369
    %371 = vmatprep.subr.mxu0 0.0
    %v372 = vand.u32 %v67, 4294901760
    %v373 = vsub.f32 %v67, %v372
    %374 = vmatpush1.msra.mxu0 %v373
    %375 = vmatprep.subr.mxu0 0.0
    %v376 = vand.u32 %v66, 4294901760
    %v377 = vsub.f32 %v66, %v376
    %378 = vmatpush1.msra.mxu0 %v377
    %379 = vmatprep.subr.mxu0 0.0
    %v380 = vand.u32 %v65, 4294901760
    %v381 = vsub.f32 %v65, %v380
    %382 = vmatpush1.msra.mxu0 %v381
    %383 = vmatprep.subr.mxu0 0.0
    %v384 = vand.u32 %v64, 4294901760
    %v385 = vsub.f32 %v64, %v384
    %386 = vmatpush1.msra.mxu0 %v385
    %387 = vmatprep.subr.mxu0 0.0
    %v388 = vand.u32 %v63, 4294901760
    %v389 = vsub.f32 %v63, %v388
    %390 = vmatpush1.msra.mxu0 %v389
    %391 = vmatprep.subr.mxu0 0.0
    %v392 = vand.u32 %v62, 4294901760
    %v393 = vsub.f32 %v62, %v392
    %394 = vmatpush1.msra.mxu0 %v393
    %395 = vmatprep.subr.mxu0 0.0
    %v396 = vand.u32 %v61, 4294901760
    %v397 = vsub.f32 %v61, %v396
    %398 = vmatpush1.msra.mxu0 %v397
    %399 = vmatprep.subr.mxu0 0.0
    %400 = vmatpush2.msra.mxu0 0.0
    %401 = vmatprep.subr.mxu0 0.0
    %402 = vmatpush2.msra.mxu0 0.0
    %403 = vmatprep.subr.mxu0 0.0
    %404 = vmatpush2.msra.mxu0 0.0
    %405 = vmatprep.subr.mxu0 0.0
    %406 = vmatpush2.msra.mxu0 0.0
    %407 = vmatprep.subr.mxu0 0.0
    %408 = vmatpush2.msra.mxu0 0.0
    %409 = vmatprep.subr.mxu0 0.0
    %410 = vmatpush2.msra.mxu0 0.0
    %411 = vmatprep.subr.mxu0 0.0
    %412 = vmatpush2.msra.mxu0 0.0
    %413 = vmatprep.subr.mxu0 0.0
    %414 = vmatpush2.msra.mxu0 0.0
    %415 = vmatprep.subr.mxu0 0.0
    %416 = vmatpush2.msra.mxu0 0.0
    %417 = vmatprep.subr.mxu0 0.0
    %418 = vmatpush2.msra.mxu0 0.0
    %419 = vmatprep.subr.mxu0 0.0
    %420 = vmatpush2.msra.mxu0 0.0
    %421 = vmatprep.subr.mxu0 0.0
    %422 = vmatpush2.msra.mxu0 0.0
    %423 = vmatprep.subr.mxu0 0.0
    %424 = vmatpush2.msra.mxu0 0.0
    %425 = vmatprep.subr.mxu0 0.0
    %426 = vmatpush2.msra.mxu0 0.0
    %427 = vmatprep.subr.mxu0 0.0
    %428 = vmatpush2.msra.mxu0 0.0
    %429 = vmatprep.subr.mxu0 0.0
    %430 = vmatpush2.msra.mxu0 0.0
    %431 = vmatprep.mubr.f32.mxu0 0.0
    %v432 = vand.u32 %v60, 4294901760
    %v433 = vsub.f32 %v60, %v432
    %434 = vmatmul.mubr.f32.gmra.mxu0 %v433
    %v435 = vpop.f32.mrf.mxu0
    %v436 = vadd.f32 %v332, %v435
    %v437 = vpop.f32.mrf.mxu0
    %438 = vdwg.mxu0
    %439 = vmatprep.subr.mxu0 0.0
    %v440 = vand.u32 %v76, 4294901760
    %441 = vmatpush1.msra.mxu0 %v440
    %442 = vmatprep.subr.mxu0 0.0
    %v443 = vand.u32 %v75, 4294901760
    %444 = vmatpush1.msra.mxu0 %v443
    %445 = vmatprep.subr.mxu0 0.0
    %v446 = vand.u32 %v74, 4294901760
    %447 = vmatpush1.msra.mxu0 %v446
    %448 = vmatprep.subr.mxu0 0.0
    %v449 = vand.u32 %v73, 4294901760
    %450 = vmatpush1.msra.mxu0 %v449
    %451 = vmatprep.subr.mxu0 0.0
    %v452 = vand.u32 %v72, 4294901760
    %453 = vmatpush1.msra.mxu0 %v452
    %454 = vmatprep.subr.mxu0 0.0
    %v455 = vand.u32 %v71, 4294901760
    %456 = vmatpush1.msra.mxu0 %v455
    %457 = vmatprep.subr.mxu0 0.0
    %v458 = vand.u32 %v70, 4294901760
    %459 = vmatpush1.msra.mxu0 %v458
    %460 = vmatprep.subr.mxu0 0.0
    %v461 = vand.u32 %v69, 4294901760
    %462 = vmatpush1.msra.mxu0 %v461
    %463 = vmatprep.subr.mxu0 0.0
    %v464 = vand.u32 %v68, 4294901760
    %465 = vmatpush1.msra.mxu0 %v464
    %466 = vmatprep.subr.mxu0 0.0
    %v467 = vand.u32 %v67, 4294901760
    %468 = vmatpush1.msra.mxu0 %v467
    %469 = vmatprep.subr.mxu0 0.0
    %v470 = vand.u32 %v66, 4294901760
    %471 = vmatpush1.msra.mxu0 %v470
    %472 = vmatprep.subr.mxu0 0.0
    %v473 = vand.u32 %v65, 4294901760
    %474 = vmatpush1.msra.mxu0 %v473
    %475 = vmatprep.subr.mxu0 0.0
    %v476 = vand.u32 %v64, 4294901760
    %477 = vmatpush1.msra.mxu0 %v476
    %478 = vmatprep.subr.mxu0 0.0
    %v479 = vand.u32 %v63, 4294901760
    %480 = vmatpush1.msra.mxu0 %v479
    %481 = vmatprep.subr.mxu0 0.0
    %v482 = vand.u32 %v62, 4294901760
    %483 = vmatpush1.msra.mxu0 %v482
    %484 = vmatprep.subr.mxu0 0.0
    %v485 = vand.u32 %v61, 4294901760
    %486 = vmatpush1.msra.mxu0 %v485
    %487 = vmatprep.subr.mxu0 0.0
    %488 = vmatpush2.msra.mxu0 0.0
    %489 = vmatprep.subr.mxu0 0.0
    %490 = vmatpush2.msra.mxu0 0.0
    %491 = vmatprep.subr.mxu0 0.0
    %492 = vmatpush2.msra.mxu0 0.0
    %493 = vmatprep.subr.mxu0 0.0
    %494 = vmatpush2.msra.mxu0 0.0
    %495 = vmatprep.subr.mxu0 0.0
    %496 = vmatpush2.msra.mxu0 0.0
    %497 = vmatprep.subr.mxu0 0.0
    %498 = vmatpush2.msra.mxu0 0.0
    %499 = vmatprep.subr.mxu0 0.0
    %500 = vmatpush2.msra.mxu0 0.0
    %501 = vmatprep.subr.mxu0 0.0
    %502 = vmatpush2.msra.mxu0 0.0
    %503 = vmatprep.subr.mxu0 0.0
    %504 = vmatpush2.msra.mxu0 0.0
    %505 = vmatprep.subr.mxu0 0.0
    %506 = vmatpush2.msra.mxu0 0.0
    %507 = vmatprep.subr.mxu0 0.0
    %508 = vmatpush2.msra.mxu0 0.0
    %509 = vmatprep.subr.mxu0 0.0
    %510 = vmatpush2.msra.mxu0 0.0
    %511 = vmatprep.subr.mxu0 0.0
    %512 = vmatpush2.msra.mxu0 0.0
    %513 = vmatprep.subr.mxu0 0.0
    %514 = vmatpush2.msra.mxu0 0.0
    %515 = vmatprep.subr.mxu0 0.0
    %516 = vmatpush2.msra.mxu0 0.0
    %517 = vmatprep.subr.mxu0 0.0
    %518 = vmatpush2.msra.mxu0 0.0
    %519 = vmatprep.mubr.f32.mxu0 0.0
    %v520 = vand.u32 %v60, 4294901760
    %v521 = vsub.f32 %v60, %v520
    %v522 = vand.u32 %v521, 4294901760
    %523 = vmatmul.mubr.f32.gmra.mxu0 %v522
    %v524 = vpop.f32.mrf.mxu0
    %v525 = vadd.f32 %v436, %v524
    %v526 = vpop.f32.mrf.mxu0
    %527 = vdwg.mxu0
    %528 = vmatprep.subr.mxu0 0.0
    %v529 = vand.u32 %v76, 4294901760
    %v530 = vsub.f32 %v76, %v529
    %v531 = vand.u32 %v530, 4294901760
    %532 = vmatpush1.msra.mxu0 %v531
    %533 = vmatprep.subr.mxu0 0.0
    %v534 = vand.u32 %v75, 4294901760
    %v535 = vsub.f32 %v75, %v534
    %v536 = vand.u32 %v535, 4294901760
    %537 = vmatpush1.msra.mxu0 %v536
    %538 = vmatprep.subr.mxu0 0.0
    %v539 = vand.u32 %v74, 4294901760
    %v540 = vsub.f32 %v74, %v539
    %v541 = vand.u32 %v540, 4294901760
    %542 = vmatpush1.msra.mxu0 %v541
    %543 = vmatprep.subr.mxu0 0.0
    %v544 = vand.u32 %v73, 4294901760
    %v545 = vsub.f32 %v73, %v544
    %v546 = vand.u32 %v545, 4294901760
    %547 = vmatpush1.msra.mxu0 %v546
    %548 = vmatprep.subr.mxu0 0.0
    %v549 = vand.u32 %v72, 4294901760
    %v550 = vsub.f32 %v72, %v549
    %v551 = vand.u32 %v550, 4294901760
    %552 = vmatpush1.msra.mxu0 %v551
    %553 = vmatprep.subr.mxu0 0.0
    %v554 = vand.u32 %v71, 4294901760
    %v555 = vsub.f32 %v71, %v554
    %v556 = vand.u32 %v555, 4294901760
    %557 = vmatpush1.msra.mxu0 %v556
    %558 = vmatprep.subr.mxu0 0.0
    %v559 = vand.u32 %v70, 4294901760
    %v560 = vsub.f32 %v70, %v559
    %v561 = vand.u32 %v560, 4294901760
    %562 = vmatpush1.msra.mxu0 %v561
    %563 = vmatprep.subr.mxu0 0.0
    %v564 = vand.u32 %v69, 4294901760
    %v565 = vsub.f32 %v69, %v564
    %v566 = vand.u32 %v565, 4294901760
    %567 = vmatpush1.msra.mxu0 %v566
    %568 = vmatprep.subr.mxu0 0.0
    %v569 = vand.u32 %v68, 4294901760
    %v570 = vsub.f32 %v68, %v569
    %v571 = vand.u32 %v570, 4294901760
    %572 = vmatpush1.msra.mxu0 %v571
    %573 = vmatprep.subr.mxu0 0.0
    %v574 = vand.u32 %v67, 4294901760
    %v575 = vsub.f32 %v67, %v574
    %v576 = vand.u32 %v575, 4294901760
    %577 = vmatpush1.msra.mxu0 %v576
    %578 = vmatprep.subr.mxu0 0.0
    %v579 = vand.u32 %v66, 4294901760
    %v580 = vsub.f32 %v66, %v579
    %v581 = vand.u32 %v580, 4294901760
    %582 = vmatpush1.msra.mxu0 %v581
    %583 = vmatprep.subr.mxu0 0.0
    %v584 = vand.u32 %v65, 4294901760
    %v585 = vsub.f32 %v65, %v584
    %v586 = vand.u32 %v585, 4294901760
    %587 = vmatpush1.msra.mxu0 %v586
    %588 = vmatprep.subr.mxu0 0.0
    %v589 = vand.u32 %v64, 4294901760
    %v590 = vsub.f32 %v64, %v589
    %v591 = vand.u32 %v590, 4294901760
    %592 = vmatpush1.msra.mxu0 %v591
    %593 = vmatprep.subr.mxu0 0.0
    %v594 = vand.u32 %v63, 4294901760
    %v595 = vsub.f32 %v63, %v594
    %v596 = vand.u32 %v595, 4294901760
    %597 = vmatpush1.msra.mxu0 %v596
    %598 = vmatprep.subr.mxu0 0.0
    %v599 = vand.u32 %v62, 4294901760
    %v600 = vsub.f32 %v62, %v599
    %v601 = vand.u32 %v600, 4294901760
    %602 = vmatpush1.msra.mxu0 %v601
    %603 = vmatprep.subr.mxu0 0.0
    %v604 = vand.u32 %v61, 4294901760
    %v605 = vsub.f32 %v61, %v604
    %v606 = vand.u32 %v605, 4294901760
    %607 = vmatpush1.msra.mxu0 %v606
    %608 = vmatprep.subr.mxu0 0.0
    %609 = vmatpush2.msra.mxu0 0.0
    %610 = vmatprep.subr.mxu0 0.0
    %611 = vmatpush2.msra.mxu0 0.0
    %612 = vmatprep.subr.mxu0 0.0
    %613 = vmatpush2.msra.mxu0 0.0
    %614 = vmatprep.subr.mxu0 0.0
    %615 = vmatpush2.msra.mxu0 0.0
    %616 = vmatprep.subr.mxu0 0.0
    %617 = vmatpush2.msra.mxu0 0.0
    %618 = vmatprep.subr.mxu0 0.0
    %619 = vmatpush2.msra.mxu0 0.0
    %620 = vmatprep.subr.mxu0 0.0
    %621 = vmatpush2.msra.mxu0 0.0
    %622 = vmatprep.subr.mxu0 0.0
    %623 = vmatpush2.msra.mxu0 0.0
    %624 = vmatprep.subr.mxu0 0.0
    %625 = vmatpush2.msra.mxu0 0.0
    %626 = vmatprep.subr.mxu0 0.0
    %627 = vmatpush2.msra.mxu0 0.0
    %628 = vmatprep.subr.mxu0 0.0
    %629 = vmatpush2.msra.mxu0 0.0
    %630 = vmatprep.subr.mxu0 0.0
    %631 = vmatpush2.msra.mxu0 0.0
    %632 = vmatprep.subr.mxu0 0.0
    %633 = vmatpush2.msra.mxu0 0.0
    %634 = vmatprep.subr.mxu0 0.0
    %635 = vmatpush2.msra.mxu0 0.0
    %636 = vmatprep.subr.mxu0 0.0
    %637 = vmatpush2.msra.mxu0 0.0
    %638 = vmatprep.subr.mxu0 0.0
    %639 = vmatpush2.msra.mxu0 0.0
    %640 = vmatprep.mubr.f32.mxu0 0.0
    %v641 = vand.u32 %v60, 4294901760
    %642 = vmatmul.mubr.f32.gmra.mxu0 %v641
    %v643 = vpop.f32.mrf.mxu0
    %v644 = vadd.f32 %v525, %v643
    %v645 = vpop.f32.mrf.mxu0
    %646 = vdwg.mxu0
    %647 = vmatprep.subr.mxu0 0.0
    %v648 = vand.u32 %v76, 4294901760
    %649 = vmatpush1.msra.mxu0 %v648
    %650 = vmatprep.subr.mxu0 0.0
    %v651 = vand.u32 %v75, 4294901760
    %652 = vmatpush1.msra.mxu0 %v651
    %653 = vmatprep.subr.mxu0 0.0
    %v654 = vand.u32 %v74, 4294901760
    %655 = vmatpush1.msra.mxu0 %v654
    %656 = vmatprep.subr.mxu0 0.0
    %v657 = vand.u32 %v73, 4294901760
    %658 = vmatpush1.msra.mxu0 %v657
    %659 = vmatprep.subr.mxu0 0.0
    %v660 = vand.u32 %v72, 4294901760
    %661 = vmatpush1.msra.mxu0 %v660
    %662 = vmatprep.subr.mxu0 0.0
    %v663 = vand.u32 %v71, 4294901760
    %664 = vmatpush1.msra.mxu0 %v663
    %665 = vmatprep.subr.mxu0 0.0
    %v666 = vand.u32 %v70, 4294901760
    %667 = vmatpush1.msra.mxu0 %v666
    %668 = vmatprep.subr.mxu0 0.0
    %v669 = vand.u32 %v69, 4294901760
    %670 = vmatpush1.msra.mxu0 %v669
    %671 = vmatprep.subr.mxu0 0.0
    %v672 = vand.u32 %v68, 4294901760
    %673 = vmatpush1.msra.mxu0 %v672
    %674 = vmatprep.subr.mxu0 0.0
    %v675 = vand.u32 %v67, 4294901760
    %676 = vmatpush1.msra.mxu0 %v675
    %677 = vmatprep.subr.mxu0 0.0
    %v678 = vand.u32 %v66, 4294901760
    %679 = vmatpush1.msra.mxu0 %v678
    %680 = vmatprep.subr.mxu0 0.0
    %v681 = vand.u32 %v65, 4294901760
    %682 = vmatpush1.msra.mxu0 %v681
    %683 = vmatprep.subr.mxu0 0.0
    %v684 = vand.u32 %v64, 4294901760
    %685 = vmatpush1.msra.mxu0 %v684
    %686 = vmatprep.subr.mxu0 0.0
    %v687 = vand.u32 %v63, 4294901760
    %688 = vmatpush1.msra.mxu0 %v687
    %689 = vmatprep.subr.mxu0 0.0
    %v690 = vand.u32 %v62, 4294901760
    %691 = vmatpush1.msra.mxu0 %v690
    %692 = vmatprep.subr.mxu0 0.0
    %v693 = vand.u32 %v61, 4294901760
    %694 = vmatpush1.msra.mxu0 %v693
    %695 = vmatprep.subr.mxu0 0.0
    %696 = vmatpush2.msra.mxu0 0.0
    %697 = vmatprep.subr.mxu0 0.0
    %698 = vmatpush2.msra.mxu0 0.0
    %699 = vmatprep.subr.mxu0 0.0
    %700 = vmatpush2.msra.mxu0 0.0
    %701 = vmatprep.subr.mxu0 0.0
    %702 = vmatpush2.msra.mxu0 0.0
    %703 = vmatprep.subr.mxu0 0.0
    %704 = vmatpush2.msra.mxu0 0.0
    %705 = vmatprep.subr.mxu0 0.0
    %706 = vmatpush2.msra.mxu0 0.0
    %707 = vmatprep.subr.mxu0 0.0
    %708 = vmatpush2.msra.mxu0 0.0
    %709 = vmatprep.subr.mxu0 0.0
    %710 = vmatpush2.msra.mxu0 0.0
    %711 = vmatprep.subr.mxu0 0.0
    %712 = vmatpush2.msra.mxu0 0.0
    %713 = vmatprep.subr.mxu0 0.0
    %714 = vmatpush2.msra.mxu0 0.0
    %715 = vmatprep.subr.mxu0 0.0
    %716 = vmatpush2.msra.mxu0 0.0
    %717 = vmatprep.subr.mxu0 0.0
    %718 = vmatpush2.msra.mxu0 0.0
    %719 = vmatprep.subr.mxu0 0.0
    %720 = vmatpush2.msra.mxu0 0.0
    %721 = vmatprep.subr.mxu0 0.0
    %722 = vmatpush2.msra.mxu0 0.0
    %723 = vmatprep.subr.mxu0 0.0
    %724 = vmatpush2.msra.mxu0 0.0
    %725 = vmatprep.subr.mxu0 0.0
    %726 = vmatpush2.msra.mxu0 0.0
    %727 = vmatprep.mubr.f32.mxu0 0.0
    %v728 = vand.u32 %v60, 4294901760
    %729 = vmatmul.mubr.f32.gmra.mxu0 %v728
    %v730 = vpop.f32.mrf.mxu0
    %v731 = vadd.f32 %v644, %v730
    %v732 = vpop.f32.mrf.mxu0
    %733 = vdwg.mxu0
    %v734 = vmul.f32 %v731, 0.03125
    %735 = vmatprep.subr.mxu0 0.0
    %v736 = vand.u32 %v92, 4294901760
    %737 = vmatpush1.msra.mxu0 %v736
    %738 = vmatprep.subr.mxu0 0.0
    %v739 = vand.u32 %v91, 4294901760
    %740 = vmatpush1.msra.mxu0 %v739
    %741 = vmatprep.subr.mxu0 0.0
    %v742 = vand.u32 %v90, 4294901760
    %743 = vmatpush1.msra.mxu0 %v742
    %744 = vmatprep.subr.mxu0 0.0
    %v745 = vand.u32 %v89, 4294901760
    %746 = vmatpush1.msra.mxu0 %v745
    %747 = vmatprep.subr.mxu0 0.0
    %v748 = vand.u32 %v88, 4294901760
    %749 = vmatpush1.msra.mxu0 %v748
    %750 = vmatprep.subr.mxu0 0.0
    %v751 = vand.u32 %v87, 4294901760
    %752 = vmatpush1.msra.mxu0 %v751
    %753 = vmatprep.subr.mxu0 0.0
    %v754 = vand.u32 %v86, 4294901760
    %755 = vmatpush1.msra.mxu0 %v754
    %756 = vmatprep.subr.mxu0 0.0
    %v757 = vand.u32 %v85, 4294901760
    %758 = vmatpush1.msra.mxu0 %v757
    %759 = vmatprep.subr.mxu0 0.0
    %v760 = vand.u32 %v84, 4294901760
    %761 = vmatpush1.msra.mxu0 %v760
    %762 = vmatprep.subr.mxu0 0.0
    %v763 = vand.u32 %v83, 4294901760
    %764 = vmatpush1.msra.mxu0 %v763
    %765 = vmatprep.subr.mxu0 0.0
    %v766 = vand.u32 %v82, 4294901760
    %767 = vmatpush1.msra.mxu0 %v766
    %768 = vmatprep.subr.mxu0 0.0
    %v769 = vand.u32 %v81, 4294901760
    %770 = vmatpush1.msra.mxu0 %v769
    %771 = vmatprep.subr.mxu0 0.0
    %v772 = vand.u32 %v80, 4294901760
    %773 = vmatpush1.msra.mxu0 %v772
    %774 = vmatprep.subr.mxu0 0.0
    %v775 = vand.u32 %v79, 4294901760
    %776 = vmatpush1.msra.mxu0 %v775
    %777 = vmatprep.subr.mxu0 0.0
    %v778 = vand.u32 %v78, 4294901760
    %779 = vmatpush1.msra.mxu0 %v778
    %780 = vmatprep.subr.mxu0 0.0
    %v781 = vand.u32 %v77, 4294901760
    %782 = vmatpush1.msra.mxu0 %v781
    %783 = vmatprep.subr.mxu0 0.0
    %784 = vmatpush2.msra.mxu0 0.0
    %785 = vmatprep.subr.mxu0 0.0
    %786 = vmatpush2.msra.mxu0 0.0
    %787 = vmatprep.subr.mxu0 0.0
    %788 = vmatpush2.msra.mxu0 0.0
    %789 = vmatprep.subr.mxu0 0.0
    %790 = vmatpush2.msra.mxu0 0.0
    %791 = vmatprep.subr.mxu0 0.0
    %792 = vmatpush2.msra.mxu0 0.0
    %793 = vmatprep.subr.mxu0 0.0
    %794 = vmatpush2.msra.mxu0 0.0
    %795 = vmatprep.subr.mxu0 0.0
    %796 = vmatpush2.msra.mxu0 0.0
    %797 = vmatprep.subr.mxu0 0.0
    %798 = vmatpush2.msra.mxu0 0.0
    %799 = vmatprep.subr.mxu0 0.0
    %800 = vmatpush2.msra.mxu0 0.0
    %801 = vmatprep.subr.mxu0 0.0
    %802 = vmatpush2.msra.mxu0 0.0
    %803 = vmatprep.subr.mxu0 0.0
    %804 = vmatpush2.msra.mxu0 0.0
    %805 = vmatprep.subr.mxu0 0.0
    %806 = vmatpush2.msra.mxu0 0.0
    %807 = vmatprep.subr.mxu0 0.0
    %808 = vmatpush2.msra.mxu0 0.0
    %809 = vmatprep.subr.mxu0 0.0
    %810 = vmatpush2.msra.mxu0 0.0
    %811 = vmatprep.subr.mxu0 0.0
    %812 = vmatpush2.msra.mxu0 0.0
    %813 = vmatprep.subr.mxu0 0.0
    %814 = vmatpush2.msra.mxu0 0.0
    %815 = vmatprep.mubr.f32.mxu0 0.0
    %v816 = vand.u32 %v734, 4294901760
    %v817 = vsub.f32 %v734, %v816
    %v818 = vand.u32 %v817, 4294901760
    %v819 = vsub.f32 %v817, %v818
    %v820 = vand.u32 %v819, 4294901760
    %821 = vmatmul.mubr.f32.gmra.mxu0 %v820
    %v822 = vpop.f32.mrf.mxu0
    %v823 = vadd.f32 0.0, %v822
    %v824 = vpop.f32.mrf.mxu0
    %825 = vdwg.mxu0
    %826 = vmatprep.subr.mxu0 0.0
    %v827 = vand.u32 %v92, 4294901760
    %v828 = vsub.f32 %v92, %v827
    %v829 = vand.u32 %v828, 4294901760
    %v830 = vsub.f32 %v828, %v829
    %v831 = vand.u32 %v830, 4294901760
    %832 = vmatpush1.msra.mxu0 %v831
    %833 = vmatprep.subr.mxu0 0.0
    %v834 = vand.u32 %v91, 4294901760
    %v835 = vsub.f32 %v91, %v834
    %v836 = vand.u32 %v835, 4294901760
    %v837 = vsub.f32 %v835, %v836
    %v838 = vand.u32 %v837, 4294901760
    %839 = vmatpush1.msra.mxu0 %v838
    %840 = vmatprep.subr.mxu0 0.0
    %v841 = vand.u32 %v90, 4294901760
    %v842 = vsub.f32 %v90, %v841
    %v843 = vand.u32 %v842, 4294901760
    %v844 = vsub.f32 %v842, %v843
    %v845 = vand.u32 %v844, 4294901760
    %846 = vmatpush1.msra.mxu0 %v845
    %847 = vmatprep.subr.mxu0 0.0
    %v848 = vand.u32 %v89, 4294901760
    %v849 = vsub.f32 %v89, %v848
    %v850 = vand.u32 %v849, 4294901760
    %v851 = vsub.f32 %v849, %v850
    %v852 = vand.u32 %v851, 4294901760
    %853 = vmatpush1.msra.mxu0 %v852
    %854 = vmatprep.subr.mxu0 0.0
    %v855 = vand.u32 %v88, 4294901760
    %v856 = vsub.f32 %v88, %v855
    %v857 = vand.u32 %v856, 4294901760
    %v858 = vsub.f32 %v856, %v857
    %v859 = vand.u32 %v858, 4294901760
    %860 = vmatpush1.msra.mxu0 %v859
    %861 = vmatprep.subr.mxu0 0.0
    %v862 = vand.u32 %v87, 4294901760
    %v863 = vsub.f32 %v87, %v862
    %v864 = vand.u32 %v863, 4294901760
    %v865 = vsub.f32 %v863, %v864
    %v866 = vand.u32 %v865, 4294901760
    %867 = vmatpush1.msra.mxu0 %v866
    %868 = vmatprep.subr.mxu0 0.0
    %v869 = vand.u32 %v86, 4294901760
    %v870 = vsub.f32 %v86, %v869
    %v871 = vand.u32 %v870, 4294901760
    %v872 = vsub.f32 %v870, %v871
    %v873 = vand.u32 %v872, 4294901760
    %874 = vmatpush1.msra.mxu0 %v873
    %875 = vmatprep.subr.mxu0 0.0
    %v876 = vand.u32 %v85, 4294901760
    %v877 = vsub.f32 %v85, %v876
    %v878 = vand.u32 %v877, 4294901760
    %v879 = vsub.f32 %v877, %v878
    %v880 = vand.u32 %v879, 4294901760
    %881 = vmatpush1.msra.mxu0 %v880
    %882 = vmatprep.subr.mxu0 0.0
    %v883 = vand.u32 %v84, 4294901760
    %v884 = vsub.f32 %v84, %v883
    %v885 = vand.u32 %v884, 4294901760
    %v886 = vsub.f32 %v884, %v885
    %v887 = vand.u32 %v886, 4294901760
    %888 = vmatpush1.msra.mxu0 %v887
    %889 = vmatprep.subr.mxu0 0.0
    %v890 = vand.u32 %v83, 4294901760
    %v891 = vsub.f32 %v83, %v890
    %v892 = vand.u32 %v891, 4294901760
    %v893 = vsub.f32 %v891, %v892
    %v894 = vand.u32 %v893, 4294901760
    %895 = vmatpush1.msra.mxu0 %v894
    %896 = vmatprep.subr.mxu0 0.0
    %v897 = vand.u32 %v82, 4294901760
    %v898 = vsub.f32 %v82, %v897
    %v899 = vand.u32 %v898, 4294901760
    %v900 = vsub.f32 %v898, %v899
    %v901 = vand.u32 %v900, 4294901760
    %902 = vmatpush1.msra.mxu0 %v901
    %903 = vmatprep.subr.mxu0 0.0
    %v904 = vand.u32 %v81, 4294901760
    %v905 = vsub.f32 %v81, %v904
    %v906 = vand.u32 %v905, 4294901760
    %v907 = vsub.f32 %v905, %v906
    %v908 = vand.u32 %v907, 4294901760
    %909 = vmatpush1.msra.mxu0 %v908
    %910 = vmatprep.subr.mxu0 0.0
    %v911 = vand.u32 %v80, 4294901760
    %v912 = vsub.f32 %v80, %v911
    %v913 = vand.u32 %v912, 4294901760
    %v914 = vsub.f32 %v912, %v913
    %v915 = vand.u32 %v914, 4294901760
    %916 = vmatpush1.msra.mxu0 %v915
    %917 = vmatprep.subr.mxu0 0.0
    %v918 = vand.u32 %v79, 4294901760
    %v919 = vsub.f32 %v79, %v918
    %v920 = vand.u32 %v919, 4294901760
    %v921 = vsub.f32 %v919, %v920
    %v922 = vand.u32 %v921, 4294901760
    %923 = vmatpush1.msra.mxu0 %v922
    %924 = vmatprep.subr.mxu0 0.0
    %v925 = vand.u32 %v78, 4294901760
    %v926 = vsub.f32 %v78, %v925
    %v927 = vand.u32 %v926, 4294901760
    %v928 = vsub.f32 %v926, %v927
    %v929 = vand.u32 %v928, 4294901760
    %930 = vmatpush1.msra.mxu0 %v929
    %931 = vmatprep.subr.mxu0 0.0
    %v932 = vand.u32 %v77, 4294901760
    %v933 = vsub.f32 %v77, %v932
    %v934 = vand.u32 %v933, 4294901760
    %v935 = vsub.f32 %v933, %v934
    %v936 = vand.u32 %v935, 4294901760
    %937 = vmatpush1.msra.mxu0 %v936
    %938 = vmatprep.subr.mxu0 0.0
    %939 = vmatpush2.msra.mxu0 0.0
    %940 = vmatprep.subr.mxu0 0.0
    %941 = vmatpush2.msra.mxu0 0.0
    %942 = vmatprep.subr.mxu0 0.0
    %943 = vmatpush2.msra.mxu0 0.0
    %944 = vmatprep.subr.mxu0 0.0
    %945 = vmatpush2.msra.mxu0 0.0
    %946 = vmatprep.subr.mxu0 0.0
    %947 = vmatpush2.msra.mxu0 0.0
    %948 = vmatprep.subr.mxu0 0.0
    %949 = vmatpush2.msra.mxu0 0.0
    %950 = vmatprep.subr.mxu0 0.0
    %951 = vmatpush2.msra.mxu0 0.0
    %952 = vmatprep.subr.mxu0 0.0
    %953 = vmatpush2.msra.mxu0 0.0
    %954 = vmatprep.subr.mxu0 0.0
    %955 = vmatpush2.msra.mxu0 0.0
    %956 = vmatprep.subr.mxu0 0.0
    %957 = vmatpush2.msra.mxu0 0.0
    %958 = vmatprep.subr.mxu0 0.0
    %959 = vmatpush2.msra.mxu0 0.0
    %960 = vmatprep.subr.mxu0 0.0
    %961 = vmatpush2.msra.mxu0 0.0
    %962 = vmatprep.subr.mxu0 0.0
    %963 = vmatpush2.msra.mxu0 0.0
    %964 = vmatprep.subr.mxu0 0.0
    %965 = vmatpush2.msra.mxu0 0.0
    %966 = vmatprep.subr.mxu0 0.0
    %967 = vmatpush2.msra.mxu0 0.0
    %968 = vmatprep.subr.mxu0 0.0
    %969 = vmatpush2.msra.mxu0 0.0
    %970 = vmatprep.mubr.f32.mxu0 0.0
    %v971 = vand.u32 %v734, 4294901760
    %972 = vmatmul.mubr.f32.gmra.mxu0 %v971
    %v973 = vpop.f32.mrf.mxu0
    %v974 = vadd.f32 %v823, %v973
    %v975 = vpop.f32.mrf.mxu0
    %976 = vdwg.mxu0
    %977 = vmatprep.subr.mxu0 0.0
    %v978 = vand.u32 %v92, 4294901760
    %v979 = vsub.f32 %v92, %v978
    %980 = vmatpush1.msra.mxu0 %v979
    %981 = vmatprep.subr.mxu0 0.0
    %v982 = vand.u32 %v91, 4294901760
    %v983 = vsub.f32 %v91, %v982
    %984 = vmatpush1.msra.mxu0 %v983
    %985 = vmatprep.subr.mxu0 0.0
    %v986 = vand.u32 %v90, 4294901760
    %v987 = vsub.f32 %v90, %v986
    %988 = vmatpush1.msra.mxu0 %v987
    %989 = vmatprep.subr.mxu0 0.0
    %v990 = vand.u32 %v89, 4294901760
    %v991 = vsub.f32 %v89, %v990
    %992 = vmatpush1.msra.mxu0 %v991
    %993 = vmatprep.subr.mxu0 0.0
    %v994 = vand.u32 %v88, 4294901760
    %v995 = vsub.f32 %v88, %v994
    %996 = vmatpush1.msra.mxu0 %v995
    %997 = vmatprep.subr.mxu0 0.0
    %v998 = vand.u32 %v87, 4294901760
    %v999 = vsub.f32 %v87, %v998
    %1000 = vmatpush1.msra.mxu0 %v999
    %1001 = vmatprep.subr.mxu0 0.0
    %v1002 = vand.u32 %v86, 4294901760
    %v1003 = vsub.f32 %v86, %v1002
    %1004 = vmatpush1.msra.mxu0 %v1003
    %1005 = vmatprep.subr.mxu0 0.0
    %v1006 = vand.u32 %v85, 4294901760
    %v1007 = vsub.f32 %v85, %v1006
    %1008 = vmatpush1.msra.mxu0 %v1007
    %1009 = vmatprep.subr.mxu0 0.0
    %v1010 = vand.u32 %v84, 4294901760
    %v1011 = vsub.f32 %v84, %v1010
    %1012 = vmatpush1.msra.mxu0 %v1011
    %1013 = vmatprep.subr.mxu0 0.0
    %v1014 = vand.u32 %v83, 4294901760
    %v1015 = vsub.f32 %v83, %v1014
    %1016 = vmatpush1.msra.mxu0 %v1015
    %1017 = vmatprep.subr.mxu0 0.0
    %v1018 = vand.u32 %v82, 4294901760
    %v1019 = vsub.f32 %v82, %v1018
    %1020 = vmatpush1.msra.mxu0 %v1019
    %1021 = vmatprep.subr.mxu0 0.0
    %v1022 = vand.u32 %v81, 4294901760
    %v1023 = vsub.f32 %v81, %v1022
    %1024 = vmatpush1.msra.mxu0 %v1023
    %1025 = vmatprep.subr.mxu0 0.0
    %v1026 = vand.u32 %v80, 4294901760
    %v1027 = vsub.f32 %v80, %v1026
    %1028 = vmatpush1.msra.mxu0 %v1027
    %1029 = vmatprep.subr.mxu0 0.0
    %v1030 = vand.u32 %v79, 4294901760
    %v1031 = vsub.f32 %v79, %v1030
    %1032 = vmatpush1.msra.mxu0 %v1031
    %1033 = vmatprep.subr.mxu0 0.0
    %v1034 = vand.u32 %v78, 4294901760
    %v1035 = vsub.f32 %v78, %v1034
    %1036 = vmatpush1.msra.mxu0 %v1035
    %1037 = vmatprep.subr.mxu0 0.0
    %v1038 = vand.u32 %v77, 4294901760
    %v1039 = vsub.f32 %v77, %v1038
    %1040 = vmatpush1.msra.mxu0 %v1039
    %1041 = vmatprep.subr.mxu0 0.0
    %1042 = vmatpush2.msra.mxu0 0.0
    %1043 = vmatprep.subr.mxu0 0.0
    %1044 = vmatpush2.msra.mxu0 0.0
    %1045 = vmatprep.subr.mxu0 0.0
    %1046 = vmatpush2.msra.mxu0 0.0
    %1047 = vmatprep.subr.mxu0 0.0
    %1048 = vmatpush2.msra.mxu0 0.0
    %1049 = vmatprep.subr.mxu0 0.0
    %1050 = vmatpush2.msra.mxu0 0.0
    %1051 = vmatprep.subr.mxu0 0.0
    %1052 = vmatpush2.msra.mxu0 0.0
    %1053 = vmatprep.subr.mxu0 0.0
    %1054 = vmatpush2.msra.mxu0 0.0
    %1055 = vmatprep.subr.mxu0 0.0
    %1056 = vmatpush2.msra.mxu0 0.0
    %1057 = vmatprep.subr.mxu0 0.0
    %1058 = vmatpush2.msra.mxu0 0.0
    %1059 = vmatprep.subr.mxu0 0.0
    %1060 = vmatpush2.msra.mxu0 0.0
    %1061 = vmatprep.subr.mxu0 0.0
    %1062 = vmatpush2.msra.mxu0 0.0
    %1063 = vmatprep.subr.mxu0 0.0
    %1064 = vmatpush2.msra.mxu0 0.0
    %1065 = vmatprep.subr.mxu0 0.0
    %1066 = vmatpush2.msra.mxu0 0.0
    %1067 = vmatprep.subr.mxu0 0.0
    %1068 = vmatpush2.msra.mxu0 0.0
    %1069 = vmatprep.subr.mxu0 0.0
    %1070 = vmatpush2.msra.mxu0 0.0
    %1071 = vmatprep.subr.mxu0 0.0
    %1072 = vmatpush2.msra.mxu0 0.0
    %1073 = vmatprep.mubr.f32.mxu0 0.0
    %v1074 = vand.u32 %v734, 4294901760
    %v1075 = vsub.f32 %v734, %v1074
    %1076 = vmatmul.mubr.f32.gmra.mxu0 %v1075
    %v1077 = vpop.f32.mrf.mxu0
    %v1078 = vadd.f32 %v974, %v1077
    %v1079 = vpop.f32.mrf.mxu0
    %1080 = vdwg.mxu0
    %1081 = vmatprep.subr.mxu0 0.0
    %v1082 = vand.u32 %v92, 4294901760
    %1083 = vmatpush1.msra.mxu0 %v1082
    %1084 = vmatprep.subr.mxu0 0.0
    %v1085 = vand.u32 %v91, 4294901760
    %1086 = vmatpush1.msra.mxu0 %v1085
    %1087 = vmatprep.subr.mxu0 0.0
    %v1088 = vand.u32 %v90, 4294901760
    %1089 = vmatpush1.msra.mxu0 %v1088
    %1090 = vmatprep.subr.mxu0 0.0
    %v1091 = vand.u32 %v89, 4294901760
    %1092 = vmatpush1.msra.mxu0 %v1091
    %1093 = vmatprep.subr.mxu0 0.0
    %v1094 = vand.u32 %v88, 4294901760
    %1095 = vmatpush1.msra.mxu0 %v1094
    %1096 = vmatprep.subr.mxu0 0.0
    %v1097 = vand.u32 %v87, 4294901760
    %1098 = vmatpush1.msra.mxu0 %v1097
    %1099 = vmatprep.subr.mxu0 0.0
    %v1100 = vand.u32 %v86, 4294901760
    %1101 = vmatpush1.msra.mxu0 %v1100
    %1102 = vmatprep.subr.mxu0 0.0
    %v1103 = vand.u32 %v85, 4294901760
    %1104 = vmatpush1.msra.mxu0 %v1103
    %1105 = vmatprep.subr.mxu0 0.0
    %v1106 = vand.u32 %v84, 4294901760
    %1107 = vmatpush1.msra.mxu0 %v1106
    %1108 = vmatprep.subr.mxu0 0.0
    %v1109 = vand.u32 %v83, 4294901760
    %1110 = vmatpush1.msra.mxu0 %v1109
    %1111 = vmatprep.subr.mxu0 0.0
    %v1112 = vand.u32 %v82, 4294901760
    %1113 = vmatpush1.msra.mxu0 %v1112
    %1114 = vmatprep.subr.mxu0 0.0
    %v1115 = vand.u32 %v81, 4294901760
    %1116 = vmatpush1.msra.mxu0 %v1115
    %1117 = vmatprep.subr.mxu0 0.0
    %v1118 = vand.u32 %v80, 4294901760
    %1119 = vmatpush1.msra.mxu0 %v1118
    %1120 = vmatprep.subr.mxu0 0.0
    %v1121 = vand.u32 %v79, 4294901760
    %1122 = vmatpush1.msra.mxu0 %v1121
    %1123 = vmatprep.subr.mxu0 0.0
    %v1124 = vand.u32 %v78, 4294901760
    %1125 = vmatpush1.msra.mxu0 %v1124
    %1126 = vmatprep.subr.mxu0 0.0
    %v1127 = vand.u32 %v77, 4294901760
    %1128 = vmatpush1.msra.mxu0 %v1127
    %1129 = vmatprep.subr.mxu0 0.0
    %1130 = vmatpush2.msra.mxu0 0.0
    %1131 = vmatprep.subr.mxu0 0.0
    %1132 = vmatpush2.msra.mxu0 0.0
    %1133 = vmatprep.subr.mxu0 0.0
    %1134 = vmatpush2.msra.mxu0 0.0
    %1135 = vmatprep.subr.mxu0 0.0
    %1136 = vmatpush2.msra.mxu0 0.0
    %1137 = vmatprep.subr.mxu0 0.0
    %1138 = vmatpush2.msra.mxu0 0.0
    %1139 = vmatprep.subr.mxu0 0.0
    %1140 = vmatpush2.msra.mxu0 0.0
    %1141 = vmatprep.subr.mxu0 0.0
    %1142 = vmatpush2.msra.mxu0 0.0
    %1143 = vmatprep.subr.mxu0 0.0
    %1144 = vmatpush2.msra.mxu0 0.0
    %1145 = vmatprep.subr.mxu0 0.0
    %1146 = vmatpush2.msra.mxu0 0.0
    %1147 = vmatprep.subr.mxu0 0.0
    %1148 = vmatpush2.msra.mxu0 0.0
    %1149 = vmatprep.subr.mxu0 0.0
    %1150 = vmatpush2.msra.mxu0 0.0
    %1151 = vmatprep.subr.mxu0 0.0
    %1152 = vmatpush2.msra.mxu0 0.0
    %1153 = vmatprep.subr.mxu0 0.0
    %1154 = vmatpush2.msra.mxu0 0.0
    %1155 = vmatprep.subr.mxu0 0.0
    %1156 = vmatpush2.msra.mxu0 0.0
    %1157 = vmatprep.subr.mxu0 0.0
    %1158 = vmatpush2.msra.mxu0 0.0
    %1159 = vmatprep.subr.mxu0 0.0
    %1160 = vmatpush2.msra.mxu0 0.0
    %1161 = vmatprep.mubr.f32.mxu0 0.0
    %v1162 = vand.u32 %v734, 4294901760
    %v1163 = vsub.f32 %v734, %v1162
    %v1164 = vand.u32 %v1163, 4294901760
    %1165 = vmatmul.mubr.f32.gmra.mxu0 %v1164
    %v1166 = vpop.f32.mrf.mxu0
    %v1167 = vadd.f32 %v1078, %v1166
    %v1168 = vpop.f32.mrf.mxu0
    %1169 = vdwg.mxu0
    %1170 = vmatprep.subr.mxu0 0.0
    %v1171 = vand.u32 %v92, 4294901760
    %v1172 = vsub.f32 %v92, %v1171
    %v1173 = vand.u32 %v1172, 4294901760
    %1174 = vmatpush1.msra.mxu0 %v1173
    %1175 = vmatprep.subr.mxu0 0.0
    %v1176 = vand.u32 %v91, 4294901760
    %v1177 = vsub.f32 %v91, %v1176
    %v1178 = vand.u32 %v1177, 4294901760
    %1179 = vmatpush1.msra.mxu0 %v1178
    %1180 = vmatprep.subr.mxu0 0.0
    %v1181 = vand.u32 %v90, 4294901760
    %v1182 = vsub.f32 %v90, %v1181
    %v1183 = vand.u32 %v1182, 4294901760
    %1184 = vmatpush1.msra.mxu0 %v1183
    %1185 = vmatprep.subr.mxu0 0.0
    %v1186 = vand.u32 %v89, 4294901760
    %v1187 = vsub.f32 %v89, %v1186
    %v1188 = vand.u32 %v1187, 4294901760
    %1189 = vmatpush1.msra.mxu0 %v1188
    %1190 = vmatprep.subr.mxu0 0.0
    %v1191 = vand.u32 %v88, 4294901760
    %v1192 = vsub.f32 %v88, %v1191
    %v1193 = vand.u32 %v1192, 4294901760
    %1194 = vmatpush1.msra.mxu0 %v1193
    %1195 = vmatprep.subr.mxu0 0.0
    %v1196 = vand.u32 %v87, 4294901760
    %v1197 = vsub.f32 %v87, %v1196
    %v1198 = vand.u32 %v1197, 4294901760
    %1199 = vmatpush1.msra.mxu0 %v1198
    %1200 = vmatprep.subr.mxu0 0.0
    %v1201 = vand.u32 %v86, 4294901760
    %v1202 = vsub.f32 %v86, %v1201
    %v1203 = vand.u32 %v1202, 4294901760
    %1204 = vmatpush1.msra.mxu0 %v1203
    %1205 = vmatprep.subr.mxu0 0.0
    %v1206 = vand.u32 %v85, 4294901760
    %v1207 = vsub.f32 %v85, %v1206
    %v1208 = vand.u32 %v1207, 4294901760
    %1209 = vmatpush1.msra.mxu0 %v1208
    %1210 = vmatprep.subr.mxu0 0.0
    %v1211 = vand.u32 %v84, 4294901760
    %v1212 = vsub.f32 %v84, %v1211
    %v1213 = vand.u32 %v1212, 4294901760
    %1214 = vmatpush1.msra.mxu0 %v1213
    %1215 = vmatprep.subr.mxu0 0.0
    %v1216 = vand.u32 %v83, 4294901760
    %v1217 = vsub.f32 %v83, %v1216
    %v1218 = vand.u32 %v1217, 4294901760
    %1219 = vmatpush1.msra.mxu0 %v1218
    %1220 = vmatprep.subr.mxu0 0.0
    %v1221 = vand.u32 %v82, 4294901760
    %v1222 = vsub.f32 %v82, %v1221
    %v1223 = vand.u32 %v1222, 4294901760
    %1224 = vmatpush1.msra.mxu0 %v1223
    %1225 = vmatprep.subr.mxu0 0.0
    %v1226 = vand.u32 %v81, 4294901760
    %v1227 = vsub.f32 %v81, %v1226
    %v1228 = vand.u32 %v1227, 4294901760
    %1229 = vmatpush1.msra.mxu0 %v1228
    %1230 = vmatprep.subr.mxu0 0.0
    %v1231 = vand.u32 %v80, 4294901760
    %v1232 = vsub.f32 %v80, %v1231
    %v1233 = vand.u32 %v1232, 4294901760
    %1234 = vmatpush1.msra.mxu0 %v1233
    %1235 = vmatprep.subr.mxu0 0.0
    %v1236 = vand.u32 %v79, 4294901760
    %v1237 = vsub.f32 %v79, %v1236
    %v1238 = vand.u32 %v1237, 4294901760
    %1239 = vmatpush1.msra.mxu0 %v1238
    %1240 = vmatprep.subr.mxu0 0.0
    %v1241 = vand.u32 %v78, 4294901760
    %v1242 = vsub.f32 %v78, %v1241
    %v1243 = vand.u32 %v1242, 4294901760
    %1244 = vmatpush1.msra.mxu0 %v1243
    %1245 = vmatprep.subr.mxu0 0.0
    %v1246 = vand.u32 %v77, 4294901760
    %v1247 = vsub.f32 %v77, %v1246
    %v1248 = vand.u32 %v1247, 4294901760
    %1249 = vmatpush1.msra.mxu0 %v1248
    %1250 = vmatprep.subr.mxu0 0.0
    %1251 = vmatpush2.msra.mxu0 0.0
    %1252 = vmatprep.subr.mxu0 0.0
    %1253 = vmatpush2.msra.mxu0 0.0
    %1254 = vmatprep.subr.mxu0 0.0
    %1255 = vmatpush2.msra.mxu0 0.0
    %1256 = vmatprep.subr.mxu0 0.0
    %1257 = vmatpush2.msra.mxu0 0.0
    %1258 = vmatprep.subr.mxu0 0.0
    %1259 = vmatpush2.msra.mxu0 0.0
    %1260 = vmatprep.subr.mxu0 0.0
    %1261 = vmatpush2.msra.mxu0 0.0
    %1262 = vmatprep.subr.mxu0 0.0
    %1263 = vmatpush2.msra.mxu0 0.0
    %1264 = vmatprep.subr.mxu0 0.0
    %1265 = vmatpush2.msra.mxu0 0.0
    %1266 = vmatprep.subr.mxu0 0.0
    %1267 = vmatpush2.msra.mxu0 0.0
    %1268 = vmatprep.subr.mxu0 0.0
    %1269 = vmatpush2.msra.mxu0 0.0
    %1270 = vmatprep.subr.mxu0 0.0
    %1271 = vmatpush2.msra.mxu0 0.0
    %1272 = vmatprep.subr.mxu0 0.0
    %1273 = vmatpush2.msra.mxu0 0.0
    %1274 = vmatprep.subr.mxu0 0.0
    %1275 = vmatpush2.msra.mxu0 0.0
    %1276 = vmatprep.subr.mxu0 0.0
    %1277 = vmatpush2.msra.mxu0 0.0
    %1278 = vmatprep.subr.mxu0 0.0
    %1279 = vmatpush2.msra.mxu0 0.0
    %1280 = vmatprep.subr.mxu0 0.0
    %1281 = vmatpush2.msra.mxu0 0.0
    %1282 = vmatprep.mubr.f32.mxu0 0.0
    %v1283 = vand.u32 %v734, 4294901760
    %1284 = vmatmul.mubr.f32.gmra.mxu0 %v1283
    %v1285 = vpop.f32.mrf.mxu0
    %v1286 = vadd.f32 %v1167, %v1285
    %v1287 = vpop.f32.mrf.mxu0
    %1288 = vdwg.mxu0
    %1289 = vmatprep.subr.mxu0 0.0
    %v1290 = vand.u32 %v92, 4294901760
    %1291 = vmatpush1.msra.mxu0 %v1290
    %1292 = vmatprep.subr.mxu0 0.0
    %v1293 = vand.u32 %v91, 4294901760
    %1294 = vmatpush1.msra.mxu0 %v1293
    %1295 = vmatprep.subr.mxu0 0.0
    %v1296 = vand.u32 %v90, 4294901760
    %1297 = vmatpush1.msra.mxu0 %v1296
    %1298 = vmatprep.subr.mxu0 0.0
    %v1299 = vand.u32 %v89, 4294901760
    %1300 = vmatpush1.msra.mxu0 %v1299
    %1301 = vmatprep.subr.mxu0 0.0
    %v1302 = vand.u32 %v88, 4294901760
    %1303 = vmatpush1.msra.mxu0 %v1302
    %1304 = vmatprep.subr.mxu0 0.0
    %v1305 = vand.u32 %v87, 4294901760
    %1306 = vmatpush1.msra.mxu0 %v1305
    %1307 = vmatprep.subr.mxu0 0.0
    %v1308 = vand.u32 %v86, 4294901760
    %1309 = vmatpush1.msra.mxu0 %v1308
    %1310 = vmatprep.subr.mxu0 0.0
    %v1311 = vand.u32 %v85, 4294901760
    %1312 = vmatpush1.msra.mxu0 %v1311
    %1313 = vmatprep.subr.mxu0 0.0
    %v1314 = vand.u32 %v84, 4294901760
    %1315 = vmatpush1.msra.mxu0 %v1314
    %1316 = vmatprep.subr.mxu0 0.0
    %v1317 = vand.u32 %v83, 4294901760
    %1318 = vmatpush1.msra.mxu0 %v1317
    %1319 = vmatprep.subr.mxu0 0.0
    %v1320 = vand.u32 %v82, 4294901760
    %1321 = vmatpush1.msra.mxu0 %v1320
    %1322 = vmatprep.subr.mxu0 0.0
    %v1323 = vand.u32 %v81, 4294901760
    %1324 = vmatpush1.msra.mxu0 %v1323
    %1325 = vmatprep.subr.mxu0 0.0
    %v1326 = vand.u32 %v80, 4294901760
    %1327 = vmatpush1.msra.mxu0 %v1326
    %1328 = vmatprep.subr.mxu0 0.0
    %v1329 = vand.u32 %v79, 4294901760
    %1330 = vmatpush1.msra.mxu0 %v1329
    %1331 = vmatprep.subr.mxu0 0.0
    %v1332 = vand.u32 %v78, 4294901760
    %1333 = vmatpush1.msra.mxu0 %v1332
    %1334 = vmatprep.subr.mxu0 0.0
    %v1335 = vand.u32 %v77, 4294901760
    %1336 = vmatpush1.msra.mxu0 %v1335
    %1337 = vmatprep.subr.mxu0 0.0
    %1338 = vmatpush2.msra.mxu0 0.0
    %1339 = vmatprep.subr.mxu0 0.0
    %1340 = vmatpush2.msra.mxu0 0.0
    %1341 = vmatprep.subr.mxu0 0.0
    %1342 = vmatpush2.msra.mxu0 0.0
    %1343 = vmatprep.subr.mxu0 0.0
    %1344 = vmatpush2.msra.mxu0 0.0
    %1345 = vmatprep.subr.mxu0 0.0
    %1346 = vmatpush2.msra.mxu0 0.0
    %1347 = vmatprep.subr.mxu0 0.0
    %1348 = vmatpush2.msra.mxu0 0.0
    %1349 = vmatprep.subr.mxu0 0.0
    %1350 = vmatpush2.msra.mxu0 0.0
    %1351 = vmatprep.subr.mxu0 0.0
    %1352 = vmatpush2.msra.mxu0 0.0
    %1353 = vmatprep.subr.mxu0 0.0
    %1354 = vmatpush2.msra.mxu0 0.0
    %1355 = vmatprep.subr.mxu0 0.0
    %1356 = vmatpush2.msra.mxu0 0.0
    %1357 = vmatprep.subr.mxu0 0.0
    %1358 = vmatpush2.msra.mxu0 0.0
    %1359 = vmatprep.subr.mxu0 0.0
    %1360 = vmatpush2.msra.mxu0 0.0
    %1361 = vmatprep.subr.mxu0 0.0
    %1362 = vmatpush2.msra.mxu0 0.0
    %1363 = vmatprep.subr.mxu0 0.0
    %1364 = vmatpush2.msra.mxu0 0.0
    %1365 = vmatprep.subr.mxu0 0.0
    %1366 = vmatpush2.msra.mxu0 0.0
    %1367 = vmatprep.subr.mxu0 0.0
    %1368 = vmatpush2.msra.mxu0 0.0
    %1369 = vmatprep.mubr.f32.mxu0 0.0
    %v1370 = vand.u32 %v734, 4294901760
    %1371 = vmatmul.mubr.f32.gmra.mxu0 %v1370
    %v1372 = vpop.f32.mrf.mxu0
    %v1373 = vadd.f32 %v1286, %v1372
    %v1374 = vpop.f32.mrf.mxu0
    %1375 = vdwg.mxu0
    %v1376 = vsub.f32 %v60, %v1373
    %v1377 = vmul.f32 %v1376, %v1376
    %1378 = vmatprep.subr.mxu0 0.0
    %v1379 = vand.u32 %v76, 4294901760
    %1380 = vmatpush1.msra.mxu0 %v1379
    %1381 = vmatprep.subr.mxu0 0.0
    %v1382 = vand.u32 %v75, 4294901760
    %1383 = vmatpush1.msra.mxu0 %v1382
    %1384 = vmatprep.subr.mxu0 0.0
    %v1385 = vand.u32 %v74, 4294901760
    %1386 = vmatpush1.msra.mxu0 %v1385
    %1387 = vmatprep.subr.mxu0 0.0
    %v1388 = vand.u32 %v73, 4294901760
    %1389 = vmatpush1.msra.mxu0 %v1388
    %1390 = vmatprep.subr.mxu0 0.0
    %v1391 = vand.u32 %v72, 4294901760
    %1392 = vmatpush1.msra.mxu0 %v1391
    %1393 = vmatprep.subr.mxu0 0.0
    %v1394 = vand.u32 %v71, 4294901760
    %1395 = vmatpush1.msra.mxu0 %v1394
    %1396 = vmatprep.subr.mxu0 0.0
    %v1397 = vand.u32 %v70, 4294901760
    %1398 = vmatpush1.msra.mxu0 %v1397
    %1399 = vmatprep.subr.mxu0 0.0
    %v1400 = vand.u32 %v69, 4294901760
    %1401 = vmatpush1.msra.mxu0 %v1400
    %1402 = vmatprep.subr.mxu0 0.0
    %v1403 = vand.u32 %v68, 4294901760
    %1404 = vmatpush1.msra.mxu0 %v1403
    %1405 = vmatprep.subr.mxu0 0.0
    %v1406 = vand.u32 %v67, 4294901760
    %1407 = vmatpush1.msra.mxu0 %v1406
    %1408 = vmatprep.subr.mxu0 0.0
    %v1409 = vand.u32 %v66, 4294901760
    %1410 = vmatpush1.msra.mxu0 %v1409
    %1411 = vmatprep.subr.mxu0 0.0
    %v1412 = vand.u32 %v65, 4294901760
    %1413 = vmatpush1.msra.mxu0 %v1412
    %1414 = vmatprep.subr.mxu0 0.0
    %v1415 = vand.u32 %v64, 4294901760
    %1416 = vmatpush1.msra.mxu0 %v1415
    %1417 = vmatprep.subr.mxu0 0.0
    %v1418 = vand.u32 %v63, 4294901760
    %1419 = vmatpush1.msra.mxu0 %v1418
    %1420 = vmatprep.subr.mxu0 0.0
    %v1421 = vand.u32 %v62, 4294901760
    %1422 = vmatpush1.msra.mxu0 %v1421
    %1423 = vmatprep.subr.mxu0 0.0
    %v1424 = vand.u32 %v61, 4294901760
    %1425 = vmatpush1.msra.mxu0 %v1424
    %1426 = vmatprep.subr.mxu0 0.0
    %1427 = vmatpush2.msra.mxu0 0.0
    %1428 = vmatprep.subr.mxu0 0.0
    %1429 = vmatpush2.msra.mxu0 0.0
    %1430 = vmatprep.subr.mxu0 0.0
    %1431 = vmatpush2.msra.mxu0 0.0
    %1432 = vmatprep.subr.mxu0 0.0
    %1433 = vmatpush2.msra.mxu0 0.0
    %1434 = vmatprep.subr.mxu0 0.0
    %1435 = vmatpush2.msra.mxu0 0.0
    %1436 = vmatprep.subr.mxu0 0.0
    %1437 = vmatpush2.msra.mxu0 0.0
    %1438 = vmatprep.subr.mxu0 0.0
    %1439 = vmatpush2.msra.mxu0 0.0
    %1440 = vmatprep.subr.mxu0 0.0
    %1441 = vmatpush2.msra.mxu0 0.0
    %1442 = vmatprep.subr.mxu0 0.0
    %1443 = vmatpush2.msra.mxu0 0.0
    %1444 = vmatprep.subr.mxu0 0.0
    %1445 = vmatpush2.msra.mxu0 0.0
    %1446 = vmatprep.subr.mxu0 0.0
    %1447 = vmatpush2.msra.mxu0 0.0
    %1448 = vmatprep.subr.mxu0 0.0
    %1449 = vmatpush2.msra.mxu0 0.0
    %1450 = vmatprep.subr.mxu0 0.0
    %1451 = vmatpush2.msra.mxu0 0.0
    %1452 = vmatprep.subr.mxu0 0.0
    %1453 = vmatpush2.msra.mxu0 0.0
    %1454 = vmatprep.subr.mxu0 0.0
    %1455 = vmatpush2.msra.mxu0 0.0
    %1456 = vmatprep.subr.mxu0 0.0
    %1457 = vmatpush2.msra.mxu0 0.0
    %1458 = vmatprep.mubr.f32.mxu0 0.0
    %v1459 = vand.u32 %v1377, 4294901760
    %v1460 = vsub.f32 %v1377, %v1459
    %v1461 = vand.u32 %v1460, 4294901760
    %v1462 = vsub.f32 %v1460, %v1461
    %v1463 = vand.u32 %v1462, 4294901760
    %1464 = vmatmul.mubr.f32.gmra.mxu0 %v1463
    %v1465 = vpop.f32.mrf.mxu0
    %v1466 = vadd.f32 0.0, %v1465
    %v1467 = vpop.f32.mrf.mxu0
    %1468 = vdwg.mxu0
    %1469 = vmatprep.subr.mxu0 0.0
    %v1470 = vand.u32 %v76, 4294901760
    %v1471 = vsub.f32 %v76, %v1470
    %v1472 = vand.u32 %v1471, 4294901760
    %v1473 = vsub.f32 %v1471, %v1472
    %v1474 = vand.u32 %v1473, 4294901760
    %1475 = vmatpush1.msra.mxu0 %v1474
    %1476 = vmatprep.subr.mxu0 0.0
    %v1477 = vand.u32 %v75, 4294901760
    %v1478 = vsub.f32 %v75, %v1477
    %v1479 = vand.u32 %v1478, 4294901760
    %v1480 = vsub.f32 %v1478, %v1479
    %v1481 = vand.u32 %v1480, 4294901760
    %1482 = vmatpush1.msra.mxu0 %v1481
    %1483 = vmatprep.subr.mxu0 0.0
    %v1484 = vand.u32 %v74, 4294901760
    %v1485 = vsub.f32 %v74, %v1484
    %v1486 = vand.u32 %v1485, 4294901760
    %v1487 = vsub.f32 %v1485, %v1486
    %v1488 = vand.u32 %v1487, 4294901760
    %1489 = vmatpush1.msra.mxu0 %v1488
    %1490 = vmatprep.subr.mxu0 0.0
    %v1491 = vand.u32 %v73, 4294901760
    %v1492 = vsub.f32 %v73, %v1491
    %v1493 = vand.u32 %v1492, 4294901760
    %v1494 = vsub.f32 %v1492, %v1493
    %v1495 = vand.u32 %v1494, 4294901760
    %1496 = vmatpush1.msra.mxu0 %v1495
    %1497 = vmatprep.subr.mxu0 0.0
    %v1498 = vand.u32 %v72, 4294901760
    %v1499 = vsub.f32 %v72, %v1498
    %v1500 = vand.u32 %v1499, 4294901760
    %v1501 = vsub.f32 %v1499, %v1500
    %v1502 = vand.u32 %v1501, 4294901760
    %1503 = vmatpush1.msra.mxu0 %v1502
    %1504 = vmatprep.subr.mxu0 0.0
    %v1505 = vand.u32 %v71, 4294901760
    %v1506 = vsub.f32 %v71, %v1505
    %v1507 = vand.u32 %v1506, 4294901760
    %v1508 = vsub.f32 %v1506, %v1507
    %v1509 = vand.u32 %v1508, 4294901760
    %1510 = vmatpush1.msra.mxu0 %v1509
    %1511 = vmatprep.subr.mxu0 0.0
    %v1512 = vand.u32 %v70, 4294901760
    %v1513 = vsub.f32 %v70, %v1512
    %v1514 = vand.u32 %v1513, 4294901760
    %v1515 = vsub.f32 %v1513, %v1514
    %v1516 = vand.u32 %v1515, 4294901760
    %1517 = vmatpush1.msra.mxu0 %v1516
    %1518 = vmatprep.subr.mxu0 0.0
    %v1519 = vand.u32 %v69, 4294901760
    %v1520 = vsub.f32 %v69, %v1519
    %v1521 = vand.u32 %v1520, 4294901760
    %v1522 = vsub.f32 %v1520, %v1521
    %v1523 = vand.u32 %v1522, 4294901760
    %1524 = vmatpush1.msra.mxu0 %v1523
    %1525 = vmatprep.subr.mxu0 0.0
    %v1526 = vand.u32 %v68, 4294901760
    %v1527 = vsub.f32 %v68, %v1526
    %v1528 = vand.u32 %v1527, 4294901760
    %v1529 = vsub.f32 %v1527, %v1528
    %v1530 = vand.u32 %v1529, 4294901760
    %1531 = vmatpush1.msra.mxu0 %v1530
    %1532 = vmatprep.subr.mxu0 0.0
    %v1533 = vand.u32 %v67, 4294901760
    %v1534 = vsub.f32 %v67, %v1533
    %v1535 = vand.u32 %v1534, 4294901760
    %v1536 = vsub.f32 %v1534, %v1535
    %v1537 = vand.u32 %v1536, 4294901760
    %1538 = vmatpush1.msra.mxu0 %v1537
    %1539 = vmatprep.subr.mxu0 0.0
    %v1540 = vand.u32 %v66, 4294901760
    %v1541 = vsub.f32 %v66, %v1540
    %v1542 = vand.u32 %v1541, 4294901760
    %v1543 = vsub.f32 %v1541, %v1542
    %v1544 = vand.u32 %v1543, 4294901760
    %1545 = vmatpush1.msra.mxu0 %v1544
    %1546 = vmatprep.subr.mxu0 0.0
    %v1547 = vand.u32 %v65, 4294901760
    %v1548 = vsub.f32 %v65, %v1547
    %v1549 = vand.u32 %v1548, 4294901760
    %v1550 = vsub.f32 %v1548, %v1549
    %v1551 = vand.u32 %v1550, 4294901760
    %1552 = vmatpush1.msra.mxu0 %v1551
    %1553 = vmatprep.subr.mxu0 0.0
    %v1554 = vand.u32 %v64, 4294901760
    %v1555 = vsub.f32 %v64, %v1554
    %v1556 = vand.u32 %v1555, 4294901760
    %v1557 = vsub.f32 %v1555, %v1556
    %v1558 = vand.u32 %v1557, 4294901760
    %1559 = vmatpush1.msra.mxu0 %v1558
    %1560 = vmatprep.subr.mxu0 0.0
    %v1561 = vand.u32 %v63, 4294901760
    %v1562 = vsub.f32 %v63, %v1561
    %v1563 = vand.u32 %v1562, 4294901760
    %v1564 = vsub.f32 %v1562, %v1563
    %v1565 = vand.u32 %v1564, 4294901760
    %1566 = vmatpush1.msra.mxu0 %v1565
    %1567 = vmatprep.subr.mxu0 0.0
    %v1568 = vand.u32 %v62, 4294901760
    %v1569 = vsub.f32 %v62, %v1568
    %v1570 = vand.u32 %v1569, 4294901760
    %v1571 = vsub.f32 %v1569, %v1570
    %v1572 = vand.u32 %v1571, 4294901760
    %1573 = vmatpush1.msra.mxu0 %v1572
    %1574 = vmatprep.subr.mxu0 0.0
    %v1575 = vand.u32 %v61, 4294901760
    %v1576 = vsub.f32 %v61, %v1575
    %v1577 = vand.u32 %v1576, 4294901760
    %v1578 = vsub.f32 %v1576, %v1577
    %v1579 = vand.u32 %v1578, 4294901760
    %1580 = vmatpush1.msra.mxu0 %v1579
    %1581 = vmatprep.subr.mxu0 0.0
    %1582 = vmatpush2.msra.mxu0 0.0
    %1583 = vmatprep.subr.mxu0 0.0
    %1584 = vmatpush2.msra.mxu0 0.0
    %1585 = vmatprep.subr.mxu0 0.0
    %1586 = vmatpush2.msra.mxu0 0.0
    %1587 = vmatprep.subr.mxu0 0.0
    %1588 = vmatpush2.msra.mxu0 0.0
    %1589 = vmatprep.subr.mxu0 0.0
    %1590 = vmatpush2.msra.mxu0 0.0
    %1591 = vmatprep.subr.mxu0 0.0
    %1592 = vmatpush2.msra.mxu0 0.0
    %1593 = vmatprep.subr.mxu0 0.0
    %1594 = vmatpush2.msra.mxu0 0.0
    %1595 = vmatprep.subr.mxu0 0.0
    %1596 = vmatpush2.msra.mxu0 0.0
    %1597 = vmatprep.subr.mxu0 0.0
    %1598 = vmatpush2.msra.mxu0 0.0
    %1599 = vmatprep.subr.mxu0 0.0
    %1600 = vmatpush2.msra.mxu0 0.0
    %1601 = vmatprep.subr.mxu0 0.0
    %1602 = vmatpush2.msra.mxu0 0.0
    %1603 = vmatprep.subr.mxu0 0.0
    %1604 = vmatpush2.msra.mxu0 0.0
    %1605 = vmatprep.subr.mxu0 0.0
    %1606 = vmatpush2.msra.mxu0 0.0
    %1607 = vmatprep.subr.mxu0 0.0
    %1608 = vmatpush2.msra.mxu0 0.0
    %1609 = vmatprep.subr.mxu0 0.0
    %1610 = vmatpush2.msra.mxu0 0.0
    %1611 = vmatprep.subr.mxu0 0.0
    %1612 = vmatpush2.msra.mxu0 0.0
    %1613 = vmatprep.mubr.f32.mxu0 0.0
    %v1614 = vand.u32 %v1377, 4294901760
    %1615 = vmatmul.mubr.f32.gmra.mxu0 %v1614
    %v1616 = vpop.f32.mrf.mxu0
    %v1617 = vadd.f32 %v1466, %v1616
    %v1618 = vpop.f32.mrf.mxu0
    %1619 = vdwg.mxu0
    %1620 = vmatprep.subr.mxu0 0.0
    %v1621 = vand.u32 %v76, 4294901760
    %v1622 = vsub.f32 %v76, %v1621
    %1623 = vmatpush1.msra.mxu0 %v1622
    %1624 = vmatprep.subr.mxu0 0.0
    %v1625 = vand.u32 %v75, 4294901760
    %v1626 = vsub.f32 %v75, %v1625
    %1627 = vmatpush1.msra.mxu0 %v1626
    %1628 = vmatprep.subr.mxu0 0.0
    %v1629 = vand.u32 %v74, 4294901760
    %v1630 = vsub.f32 %v74, %v1629
    %1631 = vmatpush1.msra.mxu0 %v1630
    %1632 = vmatprep.subr.mxu0 0.0
    %v1633 = vand.u32 %v73, 4294901760
    %v1634 = vsub.f32 %v73, %v1633
    %1635 = vmatpush1.msra.mxu0 %v1634
    %1636 = vmatprep.subr.mxu0 0.0
    %v1637 = vand.u32 %v72, 4294901760
    %v1638 = vsub.f32 %v72, %v1637
    %1639 = vmatpush1.msra.mxu0 %v1638
    %1640 = vmatprep.subr.mxu0 0.0
    %v1641 = vand.u32 %v71, 4294901760
    %v1642 = vsub.f32 %v71, %v1641
    %1643 = vmatpush1.msra.mxu0 %v1642
    %1644 = vmatprep.subr.mxu0 0.0
    %v1645 = vand.u32 %v70, 4294901760
    %v1646 = vsub.f32 %v70, %v1645
    %1647 = vmatpush1.msra.mxu0 %v1646
    %1648 = vmatprep.subr.mxu0 0.0
    %v1649 = vand.u32 %v69, 4294901760
    %v1650 = vsub.f32 %v69, %v1649
    %1651 = vmatpush1.msra.mxu0 %v1650
    %1652 = vmatprep.subr.mxu0 0.0
    %v1653 = vand.u32 %v68, 4294901760
    %v1654 = vsub.f32 %v68, %v1653
    %1655 = vmatpush1.msra.mxu0 %v1654
    %1656 = vmatprep.subr.mxu0 0.0
    %v1657 = vand.u32 %v67, 4294901760
    %v1658 = vsub.f32 %v67, %v1657
    %1659 = vmatpush1.msra.mxu0 %v1658
    %1660 = vmatprep.subr.mxu0 0.0
    %v1661 = vand.u32 %v66, 4294901760
    %v1662 = vsub.f32 %v66, %v1661
    %1663 = vmatpush1.msra.mxu0 %v1662
    %1664 = vmatprep.subr.mxu0 0.0
    %v1665 = vand.u32 %v65, 4294901760
    %v1666 = vsub.f32 %v65, %v1665
    %1667 = vmatpush1.msra.mxu0 %v1666
    %1668 = vmatprep.subr.mxu0 0.0
    %v1669 = vand.u32 %v64, 4294901760
    %v1670 = vsub.f32 %v64, %v1669
    %1671 = vmatpush1.msra.mxu0 %v1670
    %1672 = vmatprep.subr.mxu0 0.0
    %v1673 = vand.u32 %v63, 4294901760
    %v1674 = vsub.f32 %v63, %v1673
    %1675 = vmatpush1.msra.mxu0 %v1674
    %1676 = vmatprep.subr.mxu0 0.0
    %v1677 = vand.u32 %v62, 4294901760
    %v1678 = vsub.f32 %v62, %v1677
    %1679 = vmatpush1.msra.mxu0 %v1678
    %1680 = vmatprep.subr.mxu0 0.0
    %v1681 = vand.u32 %v61, 4294901760
    %v1682 = vsub.f32 %v61, %v1681
    %1683 = vmatpush1.msra.mxu0 %v1682
    %1684 = vmatprep.subr.mxu0 0.0
    %1685 = vmatpush2.msra.mxu0 0.0
    %1686 = vmatprep.subr.mxu0 0.0
    %1687 = vmatpush2.msra.mxu0 0.0
    %1688 = vmatprep.subr.mxu0 0.0
    %1689 = vmatpush2.msra.mxu0 0.0
    %1690 = vmatprep.subr.mxu0 0.0
    %1691 = vmatpush2.msra.mxu0 0.0
    %1692 = vmatprep.subr.mxu0 0.0
    %1693 = vmatpush2.msra.mxu0 0.0
    %1694 = vmatprep.subr.mxu0 0.0
    %1695 = vmatpush2.msra.mxu0 0.0
    %1696 = vmatprep.subr.mxu0 0.0
    %1697 = vmatpush2.msra.mxu0 0.0
    %1698 = vmatprep.subr.mxu0 0.0
    %1699 = vmatpush2.msra.mxu0 0.0
    %1700 = vmatprep.subr.mxu0 0.0
    %1701 = vmatpush2.msra.mxu0 0.0
    %1702 = vmatprep.subr.mxu0 0.0
    %1703 = vmatpush2.msra.mxu0 0.0
    %1704 = vmatprep.subr.mxu0 0.0
    %1705 = vmatpush2.msra.mxu0 0.0
    %1706 = vmatprep.subr.mxu0 0.0
    %1707 = vmatpush2.msra.mxu0 0.0
    %1708 = vmatprep.subr.mxu0 0.0
    %1709 = vmatpush2.msra.mxu0 0.0
    %1710 = vmatprep.subr.mxu0 0.0
    %1711 = vmatpush2.msra.mxu0 0.0
    %1712 = vmatprep.subr.mxu0 0.0
    %1713 = vmatpush2.msra.mxu0 0.0
    %1714 = vmatprep.subr.mxu0 0.0
    %1715 = vmatpush2.msra.mxu0 0.0
    %1716 = vmatprep.mubr.f32.mxu0 0.0
    %v1717 = vand.u32 %v1377, 4294901760
    %v1718 = vsub.f32 %v1377, %v1717
    %1719 = vmatmul.mubr.f32.gmra.mxu0 %v1718
    %v1720 = vpop.f32.mrf.mxu0
    %v1721 = vadd.f32 %v1617, %v1720
    %v1722 = vpop.f32.mrf.mxu0
    %1723 = vdwg.mxu0
    %1724 = vmatprep.subr.mxu0 0.0
    %v1725 = vand.u32 %v76, 4294901760
    %1726 = vmatpush1.msra.mxu0 %v1725
    %1727 = vmatprep.subr.mxu0 0.0
    %v1728 = vand.u32 %v75, 4294901760
    %1729 = vmatpush1.msra.mxu0 %v1728
    %1730 = vmatprep.subr.mxu0 0.0
    %v1731 = vand.u32 %v74, 4294901760
    %1732 = vmatpush1.msra.mxu0 %v1731
    %1733 = vmatprep.subr.mxu0 0.0
    %v1734 = vand.u32 %v73, 4294901760
    %1735 = vmatpush1.msra.mxu0 %v1734
    %1736 = vmatprep.subr.mxu0 0.0
    %v1737 = vand.u32 %v72, 4294901760
    %1738 = vmatpush1.msra.mxu0 %v1737
    %1739 = vmatprep.subr.mxu0 0.0
    %v1740 = vand.u32 %v71, 4294901760
    %1741 = vmatpush1.msra.mxu0 %v1740
    %1742 = vmatprep.subr.mxu0 0.0
    %v1743 = vand.u32 %v70, 4294901760
    %1744 = vmatpush1.msra.mxu0 %v1743
    %1745 = vmatprep.subr.mxu0 0.0
    %v1746 = vand.u32 %v69, 4294901760
    %1747 = vmatpush1.msra.mxu0 %v1746
    %1748 = vmatprep.subr.mxu0 0.0
    %v1749 = vand.u32 %v68, 4294901760
    %1750 = vmatpush1.msra.mxu0 %v1749
    %1751 = vmatprep.subr.mxu0 0.0
    %v1752 = vand.u32 %v67, 4294901760
    %1753 = vmatpush1.msra.mxu0 %v1752
    %1754 = vmatprep.subr.mxu0 0.0
    %v1755 = vand.u32 %v66, 4294901760
    %1756 = vmatpush1.msra.mxu0 %v1755
    %1757 = vmatprep.subr.mxu0 0.0
    %v1758 = vand.u32 %v65, 4294901760
    %1759 = vmatpush1.msra.mxu0 %v1758
    %1760 = vmatprep.subr.mxu0 0.0
    %v1761 = vand.u32 %v64, 4294901760
    %1762 = vmatpush1.msra.mxu0 %v1761
    %1763 = vmatprep.subr.mxu0 0.0
    %v1764 = vand.u32 %v63, 4294901760
    %1765 = vmatpush1.msra.mxu0 %v1764
    %1766 = vmatprep.subr.mxu0 0.0
    %v1767 = vand.u32 %v62, 4294901760
    %1768 = vmatpush1.msra.mxu0 %v1767
    %1769 = vmatprep.subr.mxu0 0.0
    %v1770 = vand.u32 %v61, 4294901760
    %1771 = vmatpush1.msra.mxu0 %v1770
    %1772 = vmatprep.subr.mxu0 0.0
    %1773 = vmatpush2.msra.mxu0 0.0
    %1774 = vmatprep.subr.mxu0 0.0
    %1775 = vmatpush2.msra.mxu0 0.0
    %1776 = vmatprep.subr.mxu0 0.0
    %1777 = vmatpush2.msra.mxu0 0.0
    %1778 = vmatprep.subr.mxu0 0.0
    %1779 = vmatpush2.msra.mxu0 0.0
    %1780 = vmatprep.subr.mxu0 0.0
    %1781 = vmatpush2.msra.mxu0 0.0
    %1782 = vmatprep.subr.mxu0 0.0
    %1783 = vmatpush2.msra.mxu0 0.0
    %1784 = vmatprep.subr.mxu0 0.0
    %1785 = vmatpush2.msra.mxu0 0.0
    %1786 = vmatprep.subr.mxu0 0.0
    %1787 = vmatpush2.msra.mxu0 0.0
    %1788 = vmatprep.subr.mxu0 0.0
    %1789 = vmatpush2.msra.mxu0 0.0
    %1790 = vmatprep.subr.mxu0 0.0
    %1791 = vmatpush2.msra.mxu0 0.0
    %1792 = vmatprep.subr.mxu0 0.0
    %1793 = vmatpush2.msra.mxu0 0.0
    %1794 = vmatprep.subr.mxu0 0.0
    %1795 = vmatpush2.msra.mxu0 0.0
    %1796 = vmatprep.subr.mxu0 0.0
    %1797 = vmatpush2.msra.mxu0 0.0
    %1798 = vmatprep.subr.mxu0 0.0
    %1799 = vmatpush2.msra.mxu0 0.0
    %1800 = vmatprep.subr.mxu0 0.0
    %1801 = vmatpush2.msra.mxu0 0.0
    %1802 = vmatprep.subr.mxu0 0.0
    %1803 = vmatpush2.msra.mxu0 0.0
    %1804 = vmatprep.mubr.f32.mxu0 0.0
    %v1805 = vand.u32 %v1377, 4294901760
    %v1806 = vsub.f32 %v1377, %v1805
    %v1807 = vand.u32 %v1806, 4294901760
    %1808 = vmatmul.mubr.f32.gmra.mxu0 %v1807
    %v1809 = vpop.f32.mrf.mxu0
    %v1810 = vadd.f32 %v1721, %v1809
    %v1811 = vpop.f32.mrf.mxu0
    %1812 = vdwg.mxu0
    %1813 = vmatprep.subr.mxu0 0.0
    %v1814 = vand.u32 %v76, 4294901760
    %v1815 = vsub.f32 %v76, %v1814
    %v1816 = vand.u32 %v1815, 4294901760
    %1817 = vmatpush1.msra.mxu0 %v1816
    %1818 = vmatprep.subr.mxu0 0.0
    %v1819 = vand.u32 %v75, 4294901760
    %v1820 = vsub.f32 %v75, %v1819
    %v1821 = vand.u32 %v1820, 4294901760
    %1822 = vmatpush1.msra.mxu0 %v1821
    %1823 = vmatprep.subr.mxu0 0.0
    %v1824 = vand.u32 %v74, 4294901760
    %v1825 = vsub.f32 %v74, %v1824
    %v1826 = vand.u32 %v1825, 4294901760
    %1827 = vmatpush1.msra.mxu0 %v1826
    %1828 = vmatprep.subr.mxu0 0.0
    %v1829 = vand.u32 %v73, 4294901760
    %v1830 = vsub.f32 %v73, %v1829
    %v1831 = vand.u32 %v1830, 4294901760
    %1832 = vmatpush1.msra.mxu0 %v1831
    %1833 = vmatprep.subr.mxu0 0.0
    %v1834 = vand.u32 %v72, 4294901760
    %v1835 = vsub.f32 %v72, %v1834
    %v1836 = vand.u32 %v1835, 4294901760
    %1837 = vmatpush1.msra.mxu0 %v1836
    %1838 = vmatprep.subr.mxu0 0.0
    %v1839 = vand.u32 %v71, 4294901760
    %v1840 = vsub.f32 %v71, %v1839
    %v1841 = vand.u32 %v1840, 4294901760
    %1842 = vmatpush1.msra.mxu0 %v1841
    %1843 = vmatprep.subr.mxu0 0.0
    %v1844 = vand.u32 %v70, 4294901760
    %v1845 = vsub.f32 %v70, %v1844
    %v1846 = vand.u32 %v1845, 4294901760
    %1847 = vmatpush1.msra.mxu0 %v1846
    %1848 = vmatprep.subr.mxu0 0.0
    %v1849 = vand.u32 %v69, 4294901760
    %v1850 = vsub.f32 %v69, %v1849
    %v1851 = vand.u32 %v1850, 4294901760
    %1852 = vmatpush1.msra.mxu0 %v1851
    %1853 = vmatprep.subr.mxu0 0.0
    %v1854 = vand.u32 %v68, 4294901760
    %v1855 = vsub.f32 %v68, %v1854
    %v1856 = vand.u32 %v1855, 4294901760
    %1857 = vmatpush1.msra.mxu0 %v1856
    %1858 = vmatprep.subr.mxu0 0.0
    %v1859 = vand.u32 %v67, 4294901760
    %v1860 = vsub.f32 %v67, %v1859
    %v1861 = vand.u32 %v1860, 4294901760
    %1862 = vmatpush1.msra.mxu0 %v1861
    %1863 = vmatprep.subr.mxu0 0.0
    %v1864 = vand.u32 %v66, 4294901760
    %v1865 = vsub.f32 %v66, %v1864
    %v1866 = vand.u32 %v1865, 4294901760
    %1867 = vmatpush1.msra.mxu0 %v1866
    %1868 = vmatprep.subr.mxu0 0.0
    %v1869 = vand.u32 %v65, 4294901760
    %v1870 = vsub.f32 %v65, %v1869
    %v1871 = vand.u32 %v1870, 4294901760
    %1872 = vmatpush1.msra.mxu0 %v1871
    %1873 = vmatprep.subr.mxu0 0.0
    %v1874 = vand.u32 %v64, 4294901760
    %v1875 = vsub.f32 %v64, %v1874
    %v1876 = vand.u32 %v1875, 4294901760
    %1877 = vmatpush1.msra.mxu0 %v1876
    %1878 = vmatprep.subr.mxu0 0.0
    %v1879 = vand.u32 %v63, 4294901760
    %v1880 = vsub.f32 %v63, %v1879
    %v1881 = vand.u32 %v1880, 4294901760
    %1882 = vmatpush1.msra.mxu0 %v1881
    %1883 = vmatprep.subr.mxu0 0.0
    %v1884 = vand.u32 %v62, 4294901760
    %v1885 = vsub.f32 %v62, %v1884
    %v1886 = vand.u32 %v1885, 4294901760
    %1887 = vmatpush1.msra.mxu0 %v1886
    %1888 = vmatprep.subr.mxu0 0.0
    %v1889 = vand.u32 %v61, 4294901760
    %v1890 = vsub.f32 %v61, %v1889
    %v1891 = vand.u32 %v1890, 4294901760
    %1892 = vmatpush1.msra.mxu0 %v1891
    %1893 = vmatprep.subr.mxu0 0.0
    %1894 = vmatpush2.msra.mxu0 0.0
    %1895 = vmatprep.subr.mxu0 0.0
    %1896 = vmatpush2.msra.mxu0 0.0
    %1897 = vmatprep.subr.mxu0 0.0
    %1898 = vmatpush2.msra.mxu0 0.0
    %1899 = vmatprep.subr.mxu0 0.0
    %1900 = vmatpush2.msra.mxu0 0.0
    %1901 = vmatprep.subr.mxu0 0.0
    %1902 = vmatpush2.msra.mxu0 0.0
    %1903 = vmatprep.subr.mxu0 0.0
    %1904 = vmatpush2.msra.mxu0 0.0
    %1905 = vmatprep.subr.mxu0 0.0
    %1906 = vmatpush2.msra.mxu0 0.0
    %1907 = vmatprep.subr.mxu0 0.0
    %1908 = vmatpush2.msra.mxu0 0.0
    %1909 = vmatprep.subr.mxu0 0.0
    %1910 = vmatpush2.msra.mxu0 0.0
    %1911 = vmatprep.subr.mxu0 0.0
    %1912 = vmatpush2.msra.mxu0 0.0
    %1913 = vmatprep.subr.mxu0 0.0
    %1914 = vmatpush2.msra.mxu0 0.0
    %1915 = vmatprep.subr.mxu0 0.0
    %1916 = vmatpush2.msra.mxu0 0.0
    %1917 = vmatprep.subr.mxu0 0.0
    %1918 = vmatpush2.msra.mxu0 0.0
    %1919 = vmatprep.subr.mxu0 0.0
    %1920 = vmatpush2.msra.mxu0 0.0
    %1921 = vmatprep.subr.mxu0 0.0
    %1922 = vmatpush2.msra.mxu0 0.0
    %1923 = vmatprep.subr.mxu0 0.0
    %1924 = vmatpush2.msra.mxu0 0.0
    %1925 = vmatprep.mubr.f32.mxu0 0.0
    %v1926 = vand.u32 %v1377, 4294901760
    %1927 = vmatmul.mubr.f32.gmra.mxu0 %v1926
    %v1928 = vpop.f32.mrf.mxu0
    %v1929 = vadd.f32 %v1810, %v1928
    %v1930 = vpop.f32.mrf.mxu0
    %1931 = vdwg.mxu0
    %1932 = vmatprep.subr.mxu0 0.0
    %v1933 = vand.u32 %v76, 4294901760
    %1934 = vmatpush1.msra.mxu0 %v1933
    %1935 = vmatprep.subr.mxu0 0.0
    %v1936 = vand.u32 %v75, 4294901760
    %1937 = vmatpush1.msra.mxu0 %v1936
    %1938 = vmatprep.subr.mxu0 0.0
    %v1939 = vand.u32 %v74, 4294901760
    %1940 = vmatpush1.msra.mxu0 %v1939
    %1941 = vmatprep.subr.mxu0 0.0
    %v1942 = vand.u32 %v73, 4294901760
    %1943 = vmatpush1.msra.mxu0 %v1942
    %1944 = vmatprep.subr.mxu0 0.0
    %v1945 = vand.u32 %v72, 4294901760
    %1946 = vmatpush1.msra.mxu0 %v1945
    %1947 = vmatprep.subr.mxu0 0.0
    %v1948 = vand.u32 %v71, 4294901760
    %1949 = vmatpush1.msra.mxu0 %v1948
    %1950 = vmatprep.subr.mxu0 0.0
    %v1951 = vand.u32 %v70, 4294901760
    %1952 = vmatpush1.msra.mxu0 %v1951
    %1953 = vmatprep.subr.mxu0 0.0
    %v1954 = vand.u32 %v69, 4294901760
    %1955 = vmatpush1.msra.mxu0 %v1954
    %1956 = vmatprep.subr.mxu0 0.0
    %v1957 = vand.u32 %v68, 4294901760
    %1958 = vmatpush1.msra.mxu0 %v1957
    %1959 = vmatprep.subr.mxu0 0.0
    %v1960 = vand.u32 %v67, 4294901760
    %1961 = vmatpush1.msra.mxu0 %v1960
    %1962 = vmatprep.subr.mxu0 0.0
    %v1963 = vand.u32 %v66, 4294901760
    %1964 = vmatpush1.msra.mxu0 %v1963
    %1965 = vmatprep.subr.mxu0 0.0
    %v1966 = vand.u32 %v65, 4294901760
    %1967 = vmatpush1.msra.mxu0 %v1966
    %1968 = vmatprep.subr.mxu0 0.0
    %v1969 = vand.u32 %v64, 4294901760
    %1970 = vmatpush1.msra.mxu0 %v1969
    %1971 = vmatprep.subr.mxu0 0.0
    %v1972 = vand.u32 %v63, 4294901760
    %1973 = vmatpush1.msra.mxu0 %v1972
    %1974 = vmatprep.subr.mxu0 0.0
    %v1975 = vand.u32 %v62, 4294901760
    %1976 = vmatpush1.msra.mxu0 %v1975
    %1977 = vmatprep.subr.mxu0 0.0
    %v1978 = vand.u32 %v61, 4294901760
    %1979 = vmatpush1.msra.mxu0 %v1978
    %1980 = vmatprep.subr.mxu0 0.0
    %1981 = vmatpush2.msra.mxu0 0.0
    %1982 = vmatprep.subr.mxu0 0.0
    %1983 = vmatpush2.msra.mxu0 0.0
    %1984 = vmatprep.subr.mxu0 0.0
    %1985 = vmatpush2.msra.mxu0 0.0
    %1986 = vmatprep.subr.mxu0 0.0
    %1987 = vmatpush2.msra.mxu0 0.0
    %1988 = vmatprep.subr.mxu0 0.0
    %1989 = vmatpush2.msra.mxu0 0.0
    %1990 = vmatprep.subr.mxu0 0.0
    %1991 = vmatpush2.msra.mxu0 0.0
    %1992 = vmatprep.subr.mxu0 0.0
    %1993 = vmatpush2.msra.mxu0 0.0
    %1994 = vmatprep.subr.mxu0 0.0
    %1995 = vmatpush2.msra.mxu0 0.0
    %1996 = vmatprep.subr.mxu0 0.0
    %1997 = vmatpush2.msra.mxu0 0.0
    %1998 = vmatprep.subr.mxu0 0.0
    %1999 = vmatpush2.msra.mxu0 0.0
    %2000 = vmatprep.subr.mxu0 0.0
    %2001 = vmatpush2.msra.mxu0 0.0
    %2002 = vmatprep.subr.mxu0 0.0
    %2003 = vmatpush2.msra.mxu0 0.0
    %2004 = vmatprep.subr.mxu0 0.0
    %2005 = vmatpush2.msra.mxu0 0.0
    %2006 = vmatprep.subr.mxu0 0.0
    %2007 = vmatpush2.msra.mxu0 0.0
    %2008 = vmatprep.subr.mxu0 0.0
    %2009 = vmatpush2.msra.mxu0 0.0
    %2010 = vmatprep.subr.mxu0 0.0
    %2011 = vmatpush2.msra.mxu0 0.0
    %2012 = vmatprep.mubr.f32.mxu0 0.0
    %v2013 = vand.u32 %v1377, 4294901760
    %2014 = vmatmul.mubr.f32.gmra.mxu0 %v2013
    %v2015 = vpop.f32.mrf.mxu0
    %v2016 = vadd.f32 %v1929, %v2015
    %v2017 = vpop.f32.mrf.mxu0
    %2018 = vdwg.mxu0
    %v2019 = vmul.f32 %v2016, 0.032258064
    %v2020 = vrsqrt.pop %v2019
    %v2021 = vmul.f32 %v2019, %v2020
    %vm2022 = vcmp.eq.f32.partialorder %v2019, inf
    %v2023 = vsel %vm2022, %v2019, %v2021
    %vm2024 = vcmp.eq.f32.partialorder %v2019, 0.0
    %v2025 = vand.u32 %v2019, 2147483648
    %v2026 = vsel %vm2024, %v2025, %v2023
    %v2027 = vadd.f32 %v2026, 0.001
    %v2028 = vrcp.pop %v2027
    %v2029 = vmul.f32 1.0, %v2028
    %2030 = vmatprep.subr.mxu0 0.0
    %v2031 = vand.u32 %v92, 4294901760
    %2032 = vmatpush1.msra.mxu0 %v2031
    %2033 = vmatprep.subr.mxu0 0.0
    %v2034 = vand.u32 %v91, 4294901760
    %2035 = vmatpush1.msra.mxu0 %v2034
    %2036 = vmatprep.subr.mxu0 0.0
    %v2037 = vand.u32 %v90, 4294901760
    %2038 = vmatpush1.msra.mxu0 %v2037
    %2039 = vmatprep.subr.mxu0 0.0
    %v2040 = vand.u32 %v89, 4294901760
    %2041 = vmatpush1.msra.mxu0 %v2040
    %2042 = vmatprep.subr.mxu0 0.0
    %v2043 = vand.u32 %v88, 4294901760
    %2044 = vmatpush1.msra.mxu0 %v2043
    %2045 = vmatprep.subr.mxu0 0.0
    %v2046 = vand.u32 %v87, 4294901760
    %2047 = vmatpush1.msra.mxu0 %v2046
    %2048 = vmatprep.subr.mxu0 0.0
    %v2049 = vand.u32 %v86, 4294901760
    %2050 = vmatpush1.msra.mxu0 %v2049
    %2051 = vmatprep.subr.mxu0 0.0
    %v2052 = vand.u32 %v85, 4294901760
    %2053 = vmatpush1.msra.mxu0 %v2052
    %2054 = vmatprep.subr.mxu0 0.0
    %v2055 = vand.u32 %v84, 4294901760
    %2056 = vmatpush1.msra.mxu0 %v2055
    %2057 = vmatprep.subr.mxu0 0.0
    %v2058 = vand.u32 %v83, 4294901760
    %2059 = vmatpush1.msra.mxu0 %v2058
    %2060 = vmatprep.subr.mxu0 0.0
    %v2061 = vand.u32 %v82, 4294901760
    %2062 = vmatpush1.msra.mxu0 %v2061
    %2063 = vmatprep.subr.mxu0 0.0
    %v2064 = vand.u32 %v81, 4294901760
    %2065 = vmatpush1.msra.mxu0 %v2064
    %2066 = vmatprep.subr.mxu0 0.0
    %v2067 = vand.u32 %v80, 4294901760
    %2068 = vmatpush1.msra.mxu0 %v2067
    %2069 = vmatprep.subr.mxu0 0.0
    %v2070 = vand.u32 %v79, 4294901760
    %2071 = vmatpush1.msra.mxu0 %v2070
    %2072 = vmatprep.subr.mxu0 0.0
    %v2073 = vand.u32 %v78, 4294901760
    %2074 = vmatpush1.msra.mxu0 %v2073
    %2075 = vmatprep.subr.mxu0 0.0
    %v2076 = vand.u32 %v77, 4294901760
    %2077 = vmatpush1.msra.mxu0 %v2076
    %2078 = vmatprep.subr.mxu0 0.0
    %2079 = vmatpush2.msra.mxu0 0.0
    %2080 = vmatprep.subr.mxu0 0.0
    %2081 = vmatpush2.msra.mxu0 0.0
    %2082 = vmatprep.subr.mxu0 0.0
    %2083 = vmatpush2.msra.mxu0 0.0
    %2084 = vmatprep.subr.mxu0 0.0
    %2085 = vmatpush2.msra.mxu0 0.0
    %2086 = vmatprep.subr.mxu0 0.0
    %2087 = vmatpush2.msra.mxu0 0.0
    %2088 = vmatprep.subr.mxu0 0.0
    %2089 = vmatpush2.msra.mxu0 0.0
    %2090 = vmatprep.subr.mxu0 0.0
    %2091 = vmatpush2.msra.mxu0 0.0
    %2092 = vmatprep.subr.mxu0 0.0
    %2093 = vmatpush2.msra.mxu0 0.0
    %2094 = vmatprep.subr.mxu0 0.0
    %2095 = vmatpush2.msra.mxu0 0.0
    %2096 = vmatprep.subr.mxu0 0.0
    %2097 = vmatpush2.msra.mxu0 0.0
    %2098 = vmatprep.subr.mxu0 0.0
    %2099 = vmatpush2.msra.mxu0 0.0
    %2100 = vmatprep.subr.mxu0 0.0
    %2101 = vmatpush2.msra.mxu0 0.0
    %2102 = vmatprep.subr.mxu0 0.0
    %2103 = vmatpush2.msra.mxu0 0.0
    %2104 = vmatprep.subr.mxu0 0.0
    %2105 = vmatpush2.msra.mxu0 0.0
    %2106 = vmatprep.subr.mxu0 0.0
    %2107 = vmatpush2.msra.mxu0 0.0
    %2108 = vmatprep.subr.mxu0 0.0
    %2109 = vmatpush2.msra.mxu0 0.0
    %2110 = vmatprep.mubr.f32.mxu0 0.0
    %v2111 = vand.u32 %v2029, 4294901760
    %v2112 = vsub.f32 %v2029, %v2111
    %v2113 = vand.u32 %v2112, 4294901760
    %v2114 = vsub.f32 %v2112, %v2113
    %v2115 = vand.u32 %v2114, 4294901760
    %2116 = vmatmul.mubr.f32.gmra.mxu0 %v2115
    %v2117 = vpop.f32.mrf.mxu0
    %v2118 = vadd.f32 0.0, %v2117
    %v2119 = vpop.f32.mrf.mxu0
    %2120 = vdwg.mxu0
    %2121 = vmatprep.subr.mxu0 0.0
    %v2122 = vand.u32 %v92, 4294901760
    %v2123 = vsub.f32 %v92, %v2122
    %v2124 = vand.u32 %v2123, 4294901760
    %v2125 = vsub.f32 %v2123, %v2124
    %v2126 = vand.u32 %v2125, 4294901760
    %2127 = vmatpush1.msra.mxu0 %v2126
    %2128 = vmatprep.subr.mxu0 0.0
    %v2129 = vand.u32 %v91, 4294901760
    %v2130 = vsub.f32 %v91, %v2129
    %v2131 = vand.u32 %v2130, 4294901760
    %v2132 = vsub.f32 %v2130, %v2131
    %v2133 = vand.u32 %v2132, 4294901760
    %2134 = vmatpush1.msra.mxu0 %v2133
    %2135 = vmatprep.subr.mxu0 0.0
    %v2136 = vand.u32 %v90, 4294901760
    %v2137 = vsub.f32 %v90, %v2136
    %v2138 = vand.u32 %v2137, 4294901760
    %v2139 = vsub.f32 %v2137, %v2138
    %v2140 = vand.u32 %v2139, 4294901760
    %2141 = vmatpush1.msra.mxu0 %v2140
    %2142 = vmatprep.subr.mxu0 0.0
    %v2143 = vand.u32 %v89, 4294901760
    %v2144 = vsub.f32 %v89, %v2143
    %v2145 = vand.u32 %v2144, 4294901760
    %v2146 = vsub.f32 %v2144, %v2145
    %v2147 = vand.u32 %v2146, 4294901760
    %2148 = vmatpush1.msra.mxu0 %v2147
    %2149 = vmatprep.subr.mxu0 0.0
    %v2150 = vand.u32 %v88, 4294901760
    %v2151 = vsub.f32 %v88, %v2150
    %v2152 = vand.u32 %v2151, 4294901760
    %v2153 = vsub.f32 %v2151, %v2152
    %v2154 = vand.u32 %v2153, 4294901760
    %2155 = vmatpush1.msra.mxu0 %v2154
    %2156 = vmatprep.subr.mxu0 0.0
    %v2157 = vand.u32 %v87, 4294901760
    %v2158 = vsub.f32 %v87, %v2157
    %v2159 = vand.u32 %v2158, 4294901760
    %v2160 = vsub.f32 %v2158, %v2159
    %v2161 = vand.u32 %v2160, 4294901760
    %2162 = vmatpush1.msra.mxu0 %v2161
    %2163 = vmatprep.subr.mxu0 0.0
    %v2164 = vand.u32 %v86, 4294901760
    %v2165 = vsub.f32 %v86, %v2164
    %v2166 = vand.u32 %v2165, 4294901760
    %v2167 = vsub.f32 %v2165, %v2166
    %v2168 = vand.u32 %v2167, 4294901760
    %2169 = vmatpush1.msra.mxu0 %v2168
    %2170 = vmatprep.subr.mxu0 0.0
    %v2171 = vand.u32 %v85, 4294901760
    %v2172 = vsub.f32 %v85, %v2171
    %v2173 = vand.u32 %v2172, 4294901760
    %v2174 = vsub.f32 %v2172, %v2173
    %v2175 = vand.u32 %v2174, 4294901760
    %2176 = vmatpush1.msra.mxu0 %v2175
    %2177 = vmatprep.subr.mxu0 0.0
    %v2178 = vand.u32 %v84, 4294901760
    %v2179 = vsub.f32 %v84, %v2178
    %v2180 = vand.u32 %v2179, 4294901760
    %v2181 = vsub.f32 %v2179, %v2180
    %v2182 = vand.u32 %v2181, 4294901760
    %2183 = vmatpush1.msra.mxu0 %v2182
    %2184 = vmatprep.subr.mxu0 0.0
    %v2185 = vand.u32 %v83, 4294901760
    %v2186 = vsub.f32 %v83, %v2185
    %v2187 = vand.u32 %v2186, 4294901760
    %v2188 = vsub.f32 %v2186, %v2187
    %v2189 = vand.u32 %v2188, 4294901760
    %2190 = vmatpush1.msra.mxu0 %v2189
    %2191 = vmatprep.subr.mxu0 0.0
    %v2192 = vand.u32 %v82, 4294901760
    %v2193 = vsub.f32 %v82, %v2192
    %v2194 = vand.u32 %v2193, 4294901760
    %v2195 = vsub.f32 %v2193, %v2194
    %v2196 = vand.u32 %v2195, 4294901760
    %2197 = vmatpush1.msra.mxu0 %v2196
    %2198 = vmatprep.subr.mxu0 0.0
    %v2199 = vand.u32 %v81, 4294901760
    %v2200 = vsub.f32 %v81, %v2199
    %v2201 = vand.u32 %v2200, 4294901760
    %v2202 = vsub.f32 %v2200, %v2201
    %v2203 = vand.u32 %v2202, 4294901760
    %2204 = vmatpush1.msra.mxu0 %v2203
    %2205 = vmatprep.subr.mxu0 0.0
    %v2206 = vand.u32 %v80, 4294901760
    %v2207 = vsub.f32 %v80, %v2206
    %v2208 = vand.u32 %v2207, 4294901760
    %v2209 = vsub.f32 %v2207, %v2208
    %v2210 = vand.u32 %v2209, 4294901760
    %2211 = vmatpush1.msra.mxu0 %v2210
    %2212 = vmatprep.subr.mxu0 0.0
    %v2213 = vand.u32 %v79, 4294901760
    %v2214 = vsub.f32 %v79, %v2213
    %v2215 = vand.u32 %v2214, 4294901760
    %v2216 = vsub.f32 %v2214, %v2215
    %v2217 = vand.u32 %v2216, 4294901760
    %2218 = vmatpush1.msra.mxu0 %v2217
    %2219 = vmatprep.subr.mxu0 0.0
    %v2220 = vand.u32 %v78, 4294901760
    %v2221 = vsub.f32 %v78, %v2220
    %v2222 = vand.u32 %v2221, 4294901760
    %v2223 = vsub.f32 %v2221, %v2222
    %v2224 = vand.u32 %v2223, 4294901760
    %2225 = vmatpush1.msra.mxu0 %v2224
    %2226 = vmatprep.subr.mxu0 0.0
    %v2227 = vand.u32 %v77, 4294901760
    %v2228 = vsub.f32 %v77, %v2227
    %v2229 = vand.u32 %v2228, 4294901760
    %v2230 = vsub.f32 %v2228, %v2229
    %v2231 = vand.u32 %v2230, 4294901760
    %2232 = vmatpush1.msra.mxu0 %v2231
    %2233 = vmatprep.subr.mxu0 0.0
    %2234 = vmatpush2.msra.mxu0 0.0
    %2235 = vmatprep.subr.mxu0 0.0
    %2236 = vmatpush2.msra.mxu0 0.0
    %2237 = vmatprep.subr.mxu0 0.0
    %2238 = vmatpush2.msra.mxu0 0.0
    %2239 = vmatprep.subr.mxu0 0.0
    %2240 = vmatpush2.msra.mxu0 0.0
    %2241 = vmatprep.subr.mxu0 0.0
    %2242 = vmatpush2.msra.mxu0 0.0
    %2243 = vmatprep.subr.mxu0 0.0
    %2244 = vmatpush2.msra.mxu0 0.0
    %2245 = vmatprep.subr.mxu0 0.0
    %2246 = vmatpush2.msra.mxu0 0.0
    %2247 = vmatprep.subr.mxu0 0.0
    %2248 = vmatpush2.msra.mxu0 0.0
    %2249 = vmatprep.subr.mxu0 0.0
    %2250 = vmatpush2.msra.mxu0 0.0
    %2251 = vmatprep.subr.mxu0 0.0
    %2252 = vmatpush2.msra.mxu0 0.0
    %2253 = vmatprep.subr.mxu0 0.0
    %2254 = vmatpush2.msra.mxu0 0.0
    %2255 = vmatprep.subr.mxu0 0.0
    %2256 = vmatpush2.msra.mxu0 0.0
    %2257 = vmatprep.subr.mxu0 0.0
    %2258 = vmatpush2.msra.mxu0 0.0
    %2259 = vmatprep.subr.mxu0 0.0
    %2260 = vmatpush2.msra.mxu0 0.0
    %2261 = vmatprep.subr.mxu0 0.0
    %2262 = vmatpush2.msra.mxu0 0.0
    %2263 = vmatprep.subr.mxu0 0.0
    %2264 = vmatpush2.msra.mxu0 0.0
    %2265 = vmatprep.mubr.f32.mxu0 0.0
    %v2266 = vand.u32 %v2029, 4294901760
    %2267 = vmatmul.mubr.f32.gmra.mxu0 %v2266
    %v2268 = vpop.f32.mrf.mxu0
    %v2269 = vadd.f32 %v2118, %v2268
    %v2270 = vpop.f32.mrf.mxu0
    %2271 = vdwg.mxu0
    %2272 = vmatprep.subr.mxu0 0.0
    %v2273 = vand.u32 %v92, 4294901760
    %v2274 = vsub.f32 %v92, %v2273
    %2275 = vmatpush1.msra.mxu0 %v2274
    %2276 = vmatprep.subr.mxu0 0.0
    %v2277 = vand.u32 %v91, 4294901760
    %v2278 = vsub.f32 %v91, %v2277
    %2279 = vmatpush1.msra.mxu0 %v2278
    %2280 = vmatprep.subr.mxu0 0.0
    %v2281 = vand.u32 %v90, 4294901760
    %v2282 = vsub.f32 %v90, %v2281
    %2283 = vmatpush1.msra.mxu0 %v2282
    %2284 = vmatprep.subr.mxu0 0.0
    %v2285 = vand.u32 %v89, 4294901760
    %v2286 = vsub.f32 %v89, %v2285
    %2287 = vmatpush1.msra.mxu0 %v2286
    %2288 = vmatprep.subr.mxu0 0.0
    %v2289 = vand.u32 %v88, 4294901760
    %v2290 = vsub.f32 %v88, %v2289
    %2291 = vmatpush1.msra.mxu0 %v2290
    %2292 = vmatprep.subr.mxu0 0.0
    %v2293 = vand.u32 %v87, 4294901760
    %v2294 = vsub.f32 %v87, %v2293
    %2295 = vmatpush1.msra.mxu0 %v2294
    %2296 = vmatprep.subr.mxu0 0.0
    %v2297 = vand.u32 %v86, 4294901760
    %v2298 = vsub.f32 %v86, %v2297
    %2299 = vmatpush1.msra.mxu0 %v2298
    %2300 = vmatprep.subr.mxu0 0.0
    %v2301 = vand.u32 %v85, 4294901760
    %v2302 = vsub.f32 %v85, %v2301
    %2303 = vmatpush1.msra.mxu0 %v2302
    %2304 = vmatprep.subr.mxu0 0.0
    %v2305 = vand.u32 %v84, 4294901760
    %v2306 = vsub.f32 %v84, %v2305
    %2307 = vmatpush1.msra.mxu0 %v2306
    %2308 = vmatprep.subr.mxu0 0.0
    %v2309 = vand.u32 %v83, 4294901760
    %v2310 = vsub.f32 %v83, %v2309
    %2311 = vmatpush1.msra.mxu0 %v2310
    %2312 = vmatprep.subr.mxu0 0.0
    %v2313 = vand.u32 %v82, 4294901760
    %v2314 = vsub.f32 %v82, %v2313
    %2315 = vmatpush1.msra.mxu0 %v2314
    %2316 = vmatprep.subr.mxu0 0.0
    %v2317 = vand.u32 %v81, 4294901760
    %v2318 = vsub.f32 %v81, %v2317
    %2319 = vmatpush1.msra.mxu0 %v2318
    %2320 = vmatprep.subr.mxu0 0.0
    %v2321 = vand.u32 %v80, 4294901760
    %v2322 = vsub.f32 %v80, %v2321
    %2323 = vmatpush1.msra.mxu0 %v2322
    %2324 = vmatprep.subr.mxu0 0.0
    %v2325 = vand.u32 %v79, 4294901760
    %v2326 = vsub.f32 %v79, %v2325
    %2327 = vmatpush1.msra.mxu0 %v2326
    %2328 = vmatprep.subr.mxu0 0.0
    %v2329 = vand.u32 %v78, 4294901760
    %v2330 = vsub.f32 %v78, %v2329
    %2331 = vmatpush1.msra.mxu0 %v2330
    %2332 = vmatprep.subr.mxu0 0.0
    %v2333 = vand.u32 %v77, 4294901760
    %v2334 = vsub.f32 %v77, %v2333
    %2335 = vmatpush1.msra.mxu0 %v2334
    %2336 = vmatprep.subr.mxu0 0.0
    %2337 = vmatpush2.msra.mxu0 0.0
    %2338 = vmatprep.subr.mxu0 0.0
    %2339 = vmatpush2.msra.mxu0 0.0
    %2340 = vmatprep.subr.mxu0 0.0
    %2341 = vmatpush2.msra.mxu0 0.0
    %2342 = vmatprep.subr.mxu0 0.0
    %2343 = vmatpush2.msra.mxu0 0.0
    %2344 = vmatprep.subr.mxu0 0.0
    %2345 = vmatpush2.msra.mxu0 0.0
    %2346 = vmatprep.subr.mxu0 0.0
    %2347 = vmatpush2.msra.mxu0 0.0
    %2348 = vmatprep.subr.mxu0 0.0
    %2349 = vmatpush2.msra.mxu0 0.0
    %2350 = vmatprep.subr.mxu0 0.0
    %2351 = vmatpush2.msra.mxu0 0.0
    %2352 = vmatprep.subr.mxu0 0.0
    %2353 = vmatpush2.msra.mxu0 0.0
    %2354 = vmatprep.subr.mxu0 0.0
    %2355 = vmatpush2.msra.mxu0 0.0
    %2356 = vmatprep.subr.mxu0 0.0
    %2357 = vmatpush2.msra.mxu0 0.0
    %2358 = vmatprep.subr.mxu0 0.0
    %2359 = vmatpush2.msra.mxu0 0.0
    %2360 = vmatprep.subr.mxu0 0.0
    %2361 = vmatpush2.msra.mxu0 0.0
    %2362 = vmatprep.subr.mxu0 0.0
    %2363 = vmatpush2.msra.mxu0 0.0
    %2364 = vmatprep.subr.mxu0 0.0
    %2365 = vmatpush2.msra.mxu0 0.0
    %2366 = vmatprep.subr.mxu0 0.0
    %2367 = vmatpush2.msra.mxu0 0.0
    %2368 = vmatprep.mubr.f32.mxu0 0.0
    %v2369 = vand.u32 %v2029, 4294901760
    %v2370 = vsub.f32 %v2029, %v2369
    %2371 = vmatmul.mubr.f32.gmra.mxu0 %v2370
    %v2372 = vpop.f32.mrf.mxu0
    %v2373 = vadd.f32 %v2269, %v2372
    %v2374 = vpop.f32.mrf.mxu0
    %2375 = vdwg.mxu0
    %2376 = vmatprep.subr.mxu0 0.0
    %v2377 = vand.u32 %v92, 4294901760
    %2378 = vmatpush1.msra.mxu0 %v2377
    %2379 = vmatprep.subr.mxu0 0.0
    %v2380 = vand.u32 %v91, 4294901760
    %2381 = vmatpush1.msra.mxu0 %v2380
    %2382 = vmatprep.subr.mxu0 0.0
    %v2383 = vand.u32 %v90, 4294901760
    %2384 = vmatpush1.msra.mxu0 %v2383
    %2385 = vmatprep.subr.mxu0 0.0
    %v2386 = vand.u32 %v89, 4294901760
    %2387 = vmatpush1.msra.mxu0 %v2386
    %2388 = vmatprep.subr.mxu0 0.0
    %v2389 = vand.u32 %v88, 4294901760
    %2390 = vmatpush1.msra.mxu0 %v2389
    %2391 = vmatprep.subr.mxu0 0.0
    %v2392 = vand.u32 %v87, 4294901760
    %2393 = vmatpush1.msra.mxu0 %v2392
    %2394 = vmatprep.subr.mxu0 0.0
    %v2395 = vand.u32 %v86, 4294901760
    %2396 = vmatpush1.msra.mxu0 %v2395
    %2397 = vmatprep.subr.mxu0 0.0
    %v2398 = vand.u32 %v85, 4294901760
    %2399 = vmatpush1.msra.mxu0 %v2398
    %2400 = vmatprep.subr.mxu0 0.0
    %v2401 = vand.u32 %v84, 4294901760
    %2402 = vmatpush1.msra.mxu0 %v2401
    %2403 = vmatprep.subr.mxu0 0.0
    %v2404 = vand.u32 %v83, 4294901760
    %2405 = vmatpush1.msra.mxu0 %v2404
    %2406 = vmatprep.subr.mxu0 0.0
    %v2407 = vand.u32 %v82, 4294901760
    %2408 = vmatpush1.msra.mxu0 %v2407
    %2409 = vmatprep.subr.mxu0 0.0
    %v2410 = vand.u32 %v81, 4294901760
    %2411 = vmatpush1.msra.mxu0 %v2410
    %2412 = vmatprep.subr.mxu0 0.0
    %v2413 = vand.u32 %v80, 4294901760
    %2414 = vmatpush1.msra.mxu0 %v2413
    %2415 = vmatprep.subr.mxu0 0.0
    %v2416 = vand.u32 %v79, 4294901760
    %2417 = vmatpush1.msra.mxu0 %v2416
    %2418 = vmatprep.subr.mxu0 0.0
    %v2419 = vand.u32 %v78, 4294901760
    %2420 = vmatpush1.msra.mxu0 %v2419
    %2421 = vmatprep.subr.mxu0 0.0
    %v2422 = vand.u32 %v77, 4294901760
    %2423 = vmatpush1.msra.mxu0 %v2422
    %2424 = vmatprep.subr.mxu0 0.0
    %2425 = vmatpush2.msra.mxu0 0.0
    %2426 = vmatprep.subr.mxu0 0.0
    %2427 = vmatpush2.msra.mxu0 0.0
    %2428 = vmatprep.subr.mxu0 0.0
    %2429 = vmatpush2.msra.mxu0 0.0
    %2430 = vmatprep.subr.mxu0 0.0
    %2431 = vmatpush2.msra.mxu0 0.0
    %2432 = vmatprep.subr.mxu0 0.0
    %2433 = vmatpush2.msra.mxu0 0.0
    %2434 = vmatprep.subr.mxu0 0.0
    %2435 = vmatpush2.msra.mxu0 0.0
    %2436 = vmatprep.subr.mxu0 0.0
    %2437 = vmatpush2.msra.mxu0 0.0
    %2438 = vmatprep.subr.mxu0 0.0
    %2439 = vmatpush2.msra.mxu0 0.0
    %2440 = vmatprep.subr.mxu0 0.0
    %2441 = vmatpush2.msra.mxu0 0.0
    %2442 = vmatprep.subr.mxu0 0.0
    %2443 = vmatpush2.msra.mxu0 0.0
    %2444 = vmatprep.subr.mxu0 0.0
    %2445 = vmatpush2.msra.mxu0 0.0
    %2446 = vmatprep.subr.mxu0 0.0
    %2447 = vmatpush2.msra.mxu0 0.0
    %2448 = vmatprep.subr.mxu0 0.0
    %2449 = vmatpush2.msra.mxu0 0.0
    %2450 = vmatprep.subr.mxu0 0.0
    %2451 = vmatpush2.msra.mxu0 0.0
    %2452 = vmatprep.subr.mxu0 0.0
    %2453 = vmatpush2.msra.mxu0 0.0
    %2454 = vmatprep.subr.mxu0 0.0
    %2455 = vmatpush2.msra.mxu0 0.0
    %2456 = vmatprep.mubr.f32.mxu0 0.0
    %v2457 = vand.u32 %v2029, 4294901760
    %v2458 = vsub.f32 %v2029, %v2457
    %v2459 = vand.u32 %v2458, 4294901760
    %2460 = vmatmul.mubr.f32.gmra.mxu0 %v2459
    %v2461 = vpop.f32.mrf.mxu0
    %v2462 = vadd.f32 %v2373, %v2461
    %v2463 = vpop.f32.mrf.mxu0
    %2464 = vdwg.mxu0
    %2465 = vmatprep.subr.mxu0 0.0
    %v2466 = vand.u32 %v92, 4294901760
    %v2467 = vsub.f32 %v92, %v2466
    %v2468 = vand.u32 %v2467, 4294901760
    %2469 = vmatpush1.msra.mxu0 %v2468
    %2470 = vmatprep.subr.mxu0 0.0
    %v2471 = vand.u32 %v91, 4294901760
    %v2472 = vsub.f32 %v91, %v2471
    %v2473 = vand.u32 %v2472, 4294901760
    %2474 = vmatpush1.msra.mxu0 %v2473
    %2475 = vmatprep.subr.mxu0 0.0
    %v2476 = vand.u32 %v90, 4294901760
    %v2477 = vsub.f32 %v90, %v2476
    %v2478 = vand.u32 %v2477, 4294901760
    %2479 = vmatpush1.msra.mxu0 %v2478
    %2480 = vmatprep.subr.mxu0 0.0
    %v2481 = vand.u32 %v89, 4294901760
    %v2482 = vsub.f32 %v89, %v2481
    %v2483 = vand.u32 %v2482, 4294901760
    %2484 = vmatpush1.msra.mxu0 %v2483
    %2485 = vmatprep.subr.mxu0 0.0
    %v2486 = vand.u32 %v88, 4294901760
    %v2487 = vsub.f32 %v88, %v2486
    %v2488 = vand.u32 %v2487, 4294901760
    %2489 = vmatpush1.msra.mxu0 %v2488
    %2490 = vmatprep.subr.mxu0 0.0
    %v2491 = vand.u32 %v87, 4294901760
    %v2492 = vsub.f32 %v87, %v2491
    %v2493 = vand.u32 %v2492, 4294901760
    %2494 = vmatpush1.msra.mxu0 %v2493
    %2495 = vmatprep.subr.mxu0 0.0
    %v2496 = vand.u32 %v86, 4294901760
    %v2497 = vsub.f32 %v86, %v2496
    %v2498 = vand.u32 %v2497, 4294901760
    %2499 = vmatpush1.msra.mxu0 %v2498
    %2500 = vmatprep.subr.mxu0 0.0
    %v2501 = vand.u32 %v85, 4294901760
    %v2502 = vsub.f32 %v85, %v2501
    %v2503 = vand.u32 %v2502, 4294901760
    %2504 = vmatpush1.msra.mxu0 %v2503
    %2505 = vmatprep.subr.mxu0 0.0
    %v2506 = vand.u32 %v84, 4294901760
    %v2507 = vsub.f32 %v84, %v2506
    %v2508 = vand.u32 %v2507, 4294901760
    %2509 = vmatpush1.msra.mxu0 %v2508
    %2510 = vmatprep.subr.mxu0 0.0
    %v2511 = vand.u32 %v83, 4294901760
    %v2512 = vsub.f32 %v83, %v2511
    %v2513 = vand.u32 %v2512, 4294901760
    %2514 = vmatpush1.msra.mxu0 %v2513
    %2515 = vmatprep.subr.mxu0 0.0
    %v2516 = vand.u32 %v82, 4294901760
    %v2517 = vsub.f32 %v82, %v2516
    %v2518 = vand.u32 %v2517, 4294901760
    %2519 = vmatpush1.msra.mxu0 %v2518
    %2520 = vmatprep.subr.mxu0 0.0
    %v2521 = vand.u32 %v81, 4294901760
    %v2522 = vsub.f32 %v81, %v2521
    %v2523 = vand.u32 %v2522, 4294901760
    %2524 = vmatpush1.msra.mxu0 %v2523
    %2525 = vmatprep.subr.mxu0 0.0
    %v2526 = vand.u32 %v80, 4294901760
    %v2527 = vsub.f32 %v80, %v2526
    %v2528 = vand.u32 %v2527, 4294901760
    %2529 = vmatpush1.msra.mxu0 %v2528
    %2530 = vmatprep.subr.mxu0 0.0
    %v2531 = vand.u32 %v79, 4294901760
    %v2532 = vsub.f32 %v79, %v2531
    %v2533 = vand.u32 %v2532, 4294901760
    %2534 = vmatpush1.msra.mxu0 %v2533
    %2535 = vmatprep.subr.mxu0 0.0
    %v2536 = vand.u32 %v78, 4294901760
    %v2537 = vsub.f32 %v78, %v2536
    %v2538 = vand.u32 %v2537, 4294901760
    %2539 = vmatpush1.msra.mxu0 %v2538
    %2540 = vmatprep.subr.mxu0 0.0
    %v2541 = vand.u32 %v77, 4294901760
    %v2542 = vsub.f32 %v77, %v2541
    %v2543 = vand.u32 %v2542, 4294901760
    %2544 = vmatpush1.msra.mxu0 %v2543
    %2545 = vmatprep.subr.mxu0 0.0
    %2546 = vmatpush2.msra.mxu0 0.0
    %2547 = vmatprep.subr.mxu0 0.0
    %2548 = vmatpush2.msra.mxu0 0.0
    %2549 = vmatprep.subr.mxu0 0.0
    %2550 = vmatpush2.msra.mxu0 0.0
    %2551 = vmatprep.subr.mxu0 0.0
    %2552 = vmatpush2.msra.mxu0 0.0
    %2553 = vmatprep.subr.mxu0 0.0
    %2554 = vmatpush2.msra.mxu0 0.0
    %2555 = vmatprep.subr.mxu0 0.0
    %2556 = vmatpush2.msra.mxu0 0.0
    %2557 = vmatprep.subr.mxu0 0.0
    %2558 = vmatpush2.msra.mxu0 0.0
    %2559 = vmatprep.subr.mxu0 0.0
    %2560 = vmatpush2.msra.mxu0 0.0
    %2561 = vmatprep.subr.mxu0 0.0
    %2562 = vmatpush2.msra.mxu0 0.0
    %2563 = vmatprep.subr.mxu0 0.0
    %2564 = vmatpush2.msra.mxu0 0.0
    %2565 = vmatprep.subr.mxu0 0.0
    %2566 = vmatpush2.msra.mxu0 0.0
    %2567 = vmatprep.subr.mxu0 0.0
    %2568 = vmatpush2.msra.mxu0 0.0
    %2569 = vmatprep.subr.mxu0 0.0
    %2570 = vmatpush2.msra.mxu0 0.0
    %2571 = vmatprep.subr.mxu0 0.0
    %2572 = vmatpush2.msra.mxu0 0.0
    %2573 = vmatprep.subr.mxu0 0.0
    %2574 = vmatpush2.msra.mxu0 0.0
    %2575 = vmatprep.subr.mxu0 0.0
    %2576 = vmatpush2.msra.mxu0 0.0
    %2577 = vmatprep.mubr.f32.mxu0 0.0
    %v2578 = vand.u32 %v2029, 4294901760
    %2579 = vmatmul.mubr.f32.gmra.mxu0 %v2578
    %v2580 = vpop.f32.mrf.mxu0
    %v2581 = vadd.f32 %v2462, %v2580
    %v2582 = vpop.f32.mrf.mxu0
    %2583 = vdwg.mxu0
    %2584 = vmatprep.subr.mxu0 0.0
    %v2585 = vand.u32 %v92, 4294901760
    %2586 = vmatpush1.msra.mxu0 %v2585
    %2587 = vmatprep.subr.mxu0 0.0
    %v2588 = vand.u32 %v91, 4294901760
    %2589 = vmatpush1.msra.mxu0 %v2588
    %2590 = vmatprep.subr.mxu0 0.0
    %v2591 = vand.u32 %v90, 4294901760
    %2592 = vmatpush1.msra.mxu0 %v2591
    %2593 = vmatprep.subr.mxu0 0.0
    %v2594 = vand.u32 %v89, 4294901760
    %2595 = vmatpush1.msra.mxu0 %v2594
    %2596 = vmatprep.subr.mxu0 0.0
    %v2597 = vand.u32 %v88, 4294901760
    %2598 = vmatpush1.msra.mxu0 %v2597
    %2599 = vmatprep.subr.mxu0 0.0
    %v2600 = vand.u32 %v87, 4294901760
    %2601 = vmatpush1.msra.mxu0 %v2600
    %2602 = vmatprep.subr.mxu0 0.0
    %v2603 = vand.u32 %v86, 4294901760
    %2604 = vmatpush1.msra.mxu0 %v2603
    %2605 = vmatprep.subr.mxu0 0.0
    %v2606 = vand.u32 %v85, 4294901760
    %2607 = vmatpush1.msra.mxu0 %v2606
    %2608 = vmatprep.subr.mxu0 0.0
    %v2609 = vand.u32 %v84, 4294901760
    %2610 = vmatpush1.msra.mxu0 %v2609
    %2611 = vmatprep.subr.mxu0 0.0
    %v2612 = vand.u32 %v83, 4294901760
    %2613 = vmatpush1.msra.mxu0 %v2612
    %2614 = vmatprep.subr.mxu0 0.0
    %v2615 = vand.u32 %v82, 4294901760
    %2616 = vmatpush1.msra.mxu0 %v2615
    %2617 = vmatprep.subr.mxu0 0.0
    %v2618 = vand.u32 %v81, 4294901760
    %2619 = vmatpush1.msra.mxu0 %v2618
    %2620 = vmatprep.subr.mxu0 0.0
    %v2621 = vand.u32 %v80, 4294901760
    %2622 = vmatpush1.msra.mxu0 %v2621
    %2623 = vmatprep.subr.mxu0 0.0
    %v2624 = vand.u32 %v79, 4294901760
    %2625 = vmatpush1.msra.mxu0 %v2624
    %2626 = vmatprep.subr.mxu0 0.0
    %v2627 = vand.u32 %v78, 4294901760
    %2628 = vmatpush1.msra.mxu0 %v2627
    %2629 = vmatprep.subr.mxu0 0.0
    %v2630 = vand.u32 %v77, 4294901760
    %2631 = vmatpush1.msra.mxu0 %v2630
    %2632 = vmatprep.subr.mxu0 0.0
    %2633 = vmatpush2.msra.mxu0 0.0
    %2634 = vmatprep.subr.mxu0 0.0
    %2635 = vmatpush2.msra.mxu0 0.0
    %2636 = vmatprep.subr.mxu0 0.0
    %2637 = vmatpush2.msra.mxu0 0.0
    %2638 = vmatprep.subr.mxu0 0.0
    %2639 = vmatpush2.msra.mxu0 0.0
    %2640 = vmatprep.subr.mxu0 0.0
    %2641 = vmatpush2.msra.mxu0 0.0
    %2642 = vmatprep.subr.mxu0 0.0
    %2643 = vmatpush2.msra.mxu0 0.0
    %2644 = vmatprep.subr.mxu0 0.0
    %2645 = vmatpush2.msra.mxu0 0.0
    %2646 = vmatprep.subr.mxu0 0.0
    %2647 = vmatpush2.msra.mxu0 0.0
    %2648 = vmatprep.subr.mxu0 0.0
    %2649 = vmatpush2.msra.mxu0 0.0
    %2650 = vmatprep.subr.mxu0 0.0
    %2651 = vmatpush2.msra.mxu0 0.0
    %2652 = vmatprep.subr.mxu0 0.0
    %2653 = vmatpush2.msra.mxu0 0.0
    %2654 = vmatprep.subr.mxu0 0.0
    %2655 = vmatpush2.msra.mxu0 0.0
    %2656 = vmatprep.subr.mxu0 0.0
    %2657 = vmatpush2.msra.mxu0 0.0
    %2658 = vmatprep.subr.mxu0 0.0
    %2659 = vmatpush2.msra.mxu0 0.0
    %2660 = vmatprep.subr.mxu0 0.0
    %2661 = vmatpush2.msra.mxu0 0.0
    %2662 = vmatprep.subr.mxu0 0.0
    %2663 = vmatpush2.msra.mxu0 0.0
    %2664 = vmatprep.mubr.f32.mxu0 0.0
    %v2665 = vand.u32 %v2029, 4294901760
    %2666 = vmatmul.mubr.f32.gmra.mxu0 %v2665
    %v2667 = vpop.f32.mrf.mxu0
    %v2668 = vadd.f32 %v2581, %v2667
    %v2669 = vpop.f32.mrf.mxu0
    %2670 = vdwg.mxu0
    %v2671 = vmul.f32 %v1376, %v2668
    %v2672 = vld [vmem:[%s1] sm:$0x1]
    %v2674 = vlaneseq
    %v2675 = vshrl.u32 %v2674, 7
    %v2676 = vsub.s32 0, %v2675
    %v2677 = vrot.slane %v2672, %v2676
    %v2679 = vmul.f32 %v2671, %v2677
    %v2680 = vld [vmem:[%s2] sm:$0x1]
    %v2682 = vlaneseq
    %v2683 = vshrl.u32 %v2682, 7
    %v2684 = vsub.s32 0, %v2683
    %v2685 = vrot.slane %v2680, %v2684
    %v2687 = vadd.f32 %v2679, %v2685
    %2688 = vst [vmem:[#allocation8] sm:$0xff] %v2687
    // Predicated region
    $region34: #{tpu_custom_call.1} parent=1 // pred_check
      _
    $region35: #{tpu_custom_call.1} parent=1 // pred_check_branch
      %2690 = sbr.rel (0) target = $region37
    $region36: #{tpu_custom_call.1} parent=1 // pred_region
      %s2692 = ssub.s32 128, 128
      %2693 = vsyncadd [#allocation4], %s2692
      %s2695 = sshll.u32 [#allocation8], 4
      %s2696 = int_to_ptr.vmem [resolvable:$true] %s2695
      %2698 = dma.vmem_to_hbm [thread:$0]  %s2696, 128, %s5, [#allocation4]
    $region37: #{tpu_custom_call.1} parent=1 // pred_fallthru
      _
    // Predicated region
    $region38: #{tpu_custom_call.1} parent=1 // pred_check
      _
    $region39: #{tpu_custom_call.1} parent=1 // pred_check_branch
      %2700 = sbr.rel (0) target = $region41
    $region40: #{tpu_custom_call.1} parent=1 // pred_region
      %2701 = dma.done [#allocation4], 128
    $region41: #{tpu_custom_call.1} parent=1 // pred_fallthru
      _
    %2702 = vsyncpa [#allocation3], 1
    %2703 = vsyncpa [#allocation6], 1
    %2704 = vsyncpa [#allocation4], 1

</llo_original>
